<compile_context>
chip_gen: v5e
topology: v5e:2x2
jax: 0.10.0
libtpu: 0.0.40
codegen_flags: <defaults>
</compile_context>

<pallas_src>
import functools

import numpy as np

import jax
import jax.numpy as jnp
from jax.experimental import pallas as pl
from jax.experimental.pallas import tpu as pltpu


def _round_up(x, m):
    return ((x + m - 1) // m) * m


def _cdiv(a, b):
    return -(-a // b)


# ----------------------------------------------------------------------------
# In-kernel helpers
# ----------------------------------------------------------------------------
def _pack_partial_sums(sums):
    """Pack a few scalar partial sums into a lane-dense (1, 8, 128) f32 block.

    Value k lands at [0, 0, k]; everything else is zero.  Keeps the output
    store unmasked / lane-dense and lets each grid tile own its own block
    (so the tile grid axis can be 'parallel').
    """
    sub = jax.lax.broadcasted_iota(jnp.int32, (8, 128), 0)
    lane = jax.lax.broadcasted_iota(jnp.int32, (8, 128), 1)
    out = jnp.zeros((8, 128), jnp.float32)
    for i, s in enumerate(sums):
        out = out + jnp.where((sub == 0) & (lane == i), s, 0.0)
    return out[None, :, :]


# ----------------------------------------------------------------------------
# Pallas kernels
# ----------------------------------------------------------------------------
def _time_l1_kernel(o_ref, r_ref, out_ref):
    """Per-tile partial sum of |reconstructed - original| over a dense tile."""
    s = jnp.sum(jnp.abs(r_ref[...] - o_ref[...]))
    out_ref[...] = _pack_partial_sums((s,))


def _stft_losses_kernel(fo_ref, fr_ref, basis_ref, mel_ref, out_ref):
    """Per-tile partial sums for spectral / perceptual / mel losses.

    fo_ref, fr_ref : [F, n_fft] bf16 frames (Hann window folded into the basis)
    basis_ref      : [n_fft, 2*n_freq] bf16  (cos | -sin, window-weighted)
    mel_ref        : [n_freq, n_mels_pad] f32 mel filterbank (zero-padded cols)
    out_ref        : [1, 8, 128] f32 -> lanes 0..2 of sublane 0 hold
                     [spectral_sum, perceptual_sum, mel_sum]
    """
    basis = basis_ref[...]
    # Two MXU GEMMs (no in-kernel concat copy), bf16 operands, f32 accumulation.
    spec_o = jnp.dot(fo_ref[...], basis, preferred_element_type=jnp.float32)
    spec_r = jnp.dot(fr_ref[...], basis, preferred_element_type=jnp.float32)

    n_freq = spec_o.shape[1] // 2
    re_o, im_o = spec_o[:, :n_freq], spec_o[:, n_freq:]
    re_r, im_r = spec_r[:, :n_freq], spec_r[:, n_freq:]

    mag_o = jnp.sqrt(re_o * re_o + im_o * im_o + 1e-12)
    mag_r = jnp.sqrt(re_r * re_r + im_r * im_r + 1e-12)
    eps = 1e-8
    log_o = jnp.log(mag_o + eps)
    log_r = jnp.log(mag_r + eps)

    d_mag = mag_r - mag_o
    d_log = log_r - log_o

    # TODO(synk): SpectralLoss definition not provided; L1(mag) + L1(log-mag).
    spec_sum = jnp.sum(jnp.abs(d_mag) + jnp.abs(d_log))       # single fused reduce
    # TODO(synk): PerceptualLoss definition not provided; log-spectral L2 distance.
    perc_sum = jnp.sum(d_log * d_log)

    # Mel projection in f32 (keeps |STFT| unquantised); zero-padded / empty mel
    # columns hit the same log(eps) floor for both signals -> zero contribution.
    mel_fb = mel_ref[...]
    mel_o = jnp.dot(mag_o, mel_fb, preferred_element_type=jnp.float32)
    mel_r = jnp.dot(mag_r, mel_fb, preferred_element_type=jnp.float32)
    logmel_o = jnp.log(mel_o + eps)
    logmel_r = jnp.log(mel_r + eps)
    # TODO(synk): MelSpectralLoss definition not provided; L1(mel) + L1(log-mel).
    mel_sum = jnp.sum(jnp.abs(mel_r - mel_o) + jnp.abs(logmel_r - logmel_o))

    out_ref[...] = _pack_partial_sums((spec_sum, perc_sum, mel_sum))


# ----------------------------------------------------------------------------
# Host-side preparation (tiny, one-time, cached)
# ----------------------------------------------------------------------------
def _frame_bf16(x2, n_fft, hop):
    """[BC, T] f32 -> [BC*n_frames, n_fft] bf16 frames (center=False, no window).

    Uses a hop-chunk reshape + lane-concat instead of an XLA gather.
    TODO(synk): build frames in-VMEM from the raw audio (overlapping windows)
    to avoid the hop/n_fft-times-duplicated HBM frame slab entirely.
    """
    BC, T = x2.shape
    if T < n_fft:
        raise ValueError("audio shorter than n_fft")
    if n_fft % hop == 0:
        r = n_fft // hop
        n_chunks = T // hop
        n_frames = n_chunks - r + 1
        chunks = x2[:, :n_chunks * hop].reshape(BC, n_chunks, hop)
        parts = [chunks[:, j:j + n_frames, :] for j in range(r)]
        frames = jnp.concatenate(parts, axis=-1)                  # [BC, n_frames, n_fft]
    else:
        # TODO(synk): gather fallback when hop does not divide n_fft.
        n_frames = 1 + (T - n_fft) // hop
        idx = jnp.arange(n_frames)[:, None] * hop + jnp.arange(n_fft)[None, :]
        frames = x2[:, idx]
    return frames.reshape(BC * n_frames, n_fft).astype(jnp.bfloat16)


@functools.lru_cache(maxsize=None)
def _windowed_dft_basis_np(n_fft):
    """Hann-window-folded packed DFT basis [n_fft, 2*n_freq] as float32 NumPy.

    n_freq = n_fft // 2 (Nyquist bin dropped for lane density).
    Cached per n_fft so the cos/sin table is built once on the host.
    """
    n_freq = n_fft // 2
    n = np.arange(n_fft, dtype=np.float64)[:, None]
    k = np.arange(n_freq, dtype=np.float64)[None, :]
    ang = 2.0 * np.pi * n * k / n_fft
    # TODO(synk): sub-loss window not specified; Hann used.
    w = 0.5 - 0.5 * np.cos(2.0 * np.pi * np.arange(n_fft, dtype=np.float64) / n_fft)
    basis = np.concatenate([np.cos(ang), -np.sin(ang)], axis=1)   # [n_fft, 2*n_freq]
    return (w[:, None] * basis).astype(np.float32)


@functools.lru_cache(maxsize=None)
def _mel_filterbank_np(sample_rate, n_fft, n_mels):
    """[n_freq, n_mels_pad] f32 triangular mel filterbank, zero-padded to 128 lanes."""
    n_freq = n_fft // 2
    hz_to_mel = lambda f: 2595.0 * np.log10(1.0 + f / 700.0)
    mel_to_hz = lambda m: 700.0 * (10.0 ** (m / 2595.0) - 1.0)
    mel_pts = mel_to_hz(np.linspace(hz_to_mel(0.0), hz_to_mel(sample_rate / 2.0),
                                    n_mels + 2))
    freqs = np.arange(n_freq, dtype=np.float64) * (sample_rate / n_fft)
    lower = mel_pts[:-2][:, None]
    center = mel_pts[1:-1][:, None]
    upper = mel_pts[2:][:, None]
    up = (freqs[None, :] - lower) / np.maximum(center - lower, 1e-6)
    down = (upper - freqs[None, :]) / np.maximum(upper - center, 1e-6)
    fb = np.clip(np.minimum(up, down), 0.0, 1.0).T.astype(np.float32)   # [n_freq, n_mels]
    n_mels_pad = _round_up(n_mels, 128)
    if n_mels_pad != n_mels:
        fb = np.concatenate(
            [fb, np.zeros((n_freq, n_mels_pad - n_mels), np.float32)], axis=1)
    return fb, n_mels_pad


def _invariant_spec(shape):
    """BlockSpec for a grid-invariant operand (constant index_map).

    Requests single-buffering so e.g. the 8 MiB bf16 basis is not allocated
    twice; falls back to a plain spec if this jax version's BlockSpec does not
    accept pipeline_mode.
    """
    index_map = lambda t: (0, 0)
    try:
        return pl.BlockSpec(shape, index_map, pipeline_mode=pl.Buffered(1))
    except TypeError:
        return pl.BlockSpec(shape, index_map)


# ----------------------------------------------------------------------------
# Wrappers
# ----------------------------------------------------------------------------
def time_l1_loss(original, reconstructed, *, lane_width=1024,
                 target_tile_bytes=2 << 20):
    """mean(|reconstructed - original|), lane/sublane-dense row tiles."""
    total = int(original.size)
    o = original.reshape(-1).astype(jnp.float32)
    r = reconstructed.reshape(-1).astype(jnp.float32)

    W = lane_width                                   # multiple of 128
    rows_needed = _cdiv(total, W)
    target_rows = max(8, (target_tile_bytes // (W * 4)) // 8 * 8)
    n_tiles = max(1, _cdiv(rows_needed, target_rows))
    if n_tiles == 1 and rows_needed >= 16:
        n_tiles = 2                                  # keep both v7x TCs busy
    row_tile = _round_up(_cdiv(rows_needed, n_tiles), 8)
    rows_pad = n_tiles * row_tile
    total_pad = rows_pad * W

    if total_pad != total:
        # Pad is at most one row tile (both signals padded identically, so the
        # padded region contributes exactly 0 to the sum).
        pad = total_pad - total
        o = jnp.pad(o, (0, pad))
        r = jnp.pad(r, (0, pad))
    o = o.reshape(rows_pad, W)
    r = r.reshape(rows_pad, W)

    partials = pl.pallas_call(
        _time_l1_kernel,
        out_shape=jax.ShapeDtypeStruct((n_tiles, 8, 128), jnp.float32),
        grid=(n_tiles,),
        in_specs=[pl.BlockSpec((row_tile, W), lambda i: (i, 0)),
                  pl.BlockSpec((row_tile, W), lambda i: (i, 0))],
        out_specs=pl.BlockSpec((1, 8, 128), lambda i: (i, 0, 0)),
        compiler_params=pltpu.CompilerParams(
            dimension_semantics=("parallel",)),
    )(o, r)
    return jnp.sum(partials[:, 0, 0]) / jnp.float32(total)


def stft_domain_losses(original, reconstructed, *, sample_rate, n_fft, hop, n_mels,
                       frame_tile=None):
    """Returns (spectral_loss, mel_loss, perceptual_loss) scalars."""
    B, C, T = original.shape
    BC = B * C
    o2 = original.reshape(BC, T).astype(jnp.float32)
    r2 = reconstructed.reshape(BC, T).astype(jnp.float32)

    fo = _frame_bf16(o2, n_fft, hop)          # [N, n_fft] bf16 (unwindowed)
    fr = _frame_bf16(r2, n_fft, hop)
    N = fo.shape[0]

    n_freq = n_fft // 2
    basis = jnp.asarray(_windowed_dft_basis_np(n_fft), dtype=jnp.bfloat16)
    mel_np, n_mels_pad = _mel_filterbank_np(int(sample_rate), int(n_fft), int(n_mels))
    mel_fb = jnp.asarray(mel_np, dtype=jnp.float32)

    # n_fft-aware frame tile: ~1 MiB of bf16 frames per input per tile
    # (256 frames at n_fft=2048, 2048 frames at n_fft<=512).
    if frame_tile is None:
        frame_tile = max(256, min(2048, (1 << 20) // (n_fft * 2)))
    n_tiles = max(1, _cdiv(N, frame_tile))
    if n_tiles == 1 and N >= 32:
        n_tiles = 2                           # v7x megacore: >=2 parallel tiles
    f_tile = _round_up(_cdiv(N, n_tiles), 16)
    N_pad = n_tiles * f_tile
    if N_pad != N:                            # zero frames -> zero contribution
        pad = jnp.zeros((N_pad - N, n_fft), fo.dtype)
        fo = jnp.concatenate([fo, pad], axis=0)
        fr = jnp.concatenate([fr, pad], axis=0)

    # VMEM budget derived from actual buffer sizes (assume worst case of
    # double-buffered constants in case single-buffering is unavailable).
    bytes_per_tile = (
        2 * 2 * f_tile * n_fft * 2                 # fo + fr blocks, double-buffered bf16
        + 2 * n_fft * (2 * n_freq) * 2             # packed DFT basis (bf16)
        + 2 * n_freq * n_mels_pad * 4              # mel filterbank (f32)
        + 2 * 8 * 128 * 4                          # partial-sum output block
        + (6 * f_tile * n_fft + 6 * f_tile * n_mels_pad) * 4)   # f32 intermediates
    vmem_limit = int(min(60 * 2**20, max(32 * 2**20, bytes_per_tile * 5 // 4)))

    flops = int(2 * (2 * N_pad) * n_fft * (2 * n_freq)
                + 2 * (2 * N_pad) * n_freq * n_mels_pad)
    transcendentals = int((2 * N_pad) * n_freq * 2 + (2 * N_pad) * n_mels_pad)
    bytes_accessed = int(2 * N_pad * n_fft * 2            # fo + fr (bf16)
                         + n_fft * 2 * n_freq * 2         # packed basis
                         + n_freq * n_mels_pad * 4        # mel filterbank
                         + n_tiles * 8 * 128 * 4)         # partial-sum output

    partials = pl.pallas_call(
        _stft_losses_kernel,
        out_shape=jax.ShapeDtypeStruct((n_tiles, 8, 128), jnp.float32),
        grid=(n_tiles,),
        in_specs=[
            pl.BlockSpec((f_tile, n_fft), lambda t: (t, 0)),
            pl.BlockSpec((f_tile, n_fft), lambda t: (t, 0)),
            _invariant_spec((n_fft, 2 * n_freq)),
            _invariant_spec((n_freq, n_mels_pad)),
        ],
        out_specs=pl.BlockSpec((1, 8, 128), lambda t: (t, 0, 0)),
        compiler_params=pltpu.CompilerParams(
            dimension_semantics=("parallel",),
            vmem_limit_bytes=vmem_limit),
        cost_estimate=pl.CostEstimate(flops=flops,
                                      transcendentals=transcendentals,
                                      bytes_accessed=bytes_accessed),
    )(fo, fr, basis, mel_fb)

    sums = jnp.sum(partials[:, 0, :3], axis=0)          # [spec, perc, mel] sums
    denom_freq = jnp.float32(N * n_freq)
    denom_mel = jnp.float32(N * n_mels)
    spectral_loss = sums[0] / denom_freq
    perceptual_loss = sums[1] / denom_freq
    mel_loss = sums[2] / denom_mel
    return spectral_loss, mel_loss, perceptual_loss


def reconstruction_loss(original, reconstructed, model_outputs,
                        discriminator_outputs=None,
                        *, sample_rate=44100, n_fft=2048, hop_length=512,
                        n_mels=128,
                        time_weight=1.0, spectral_weight=1.0, mel_weight=1.0,
                        perceptual_weight=1.0, music_weight=0.5,
                        adversarial_weight=0.1, commitment_weight=0.25,
                        use_music_loss=True, use_adversarial=True):
    losses = {}

    time_loss = time_l1_loss(original, reconstructed)
    losses['time_loss'] = time_loss

    spectral_loss, mel_loss, perceptual_loss = stft_domain_losses(
        original, reconstructed, sample_rate=sample_rate, n_fft=n_fft,
        hop=hop_length, n_mels=n_mels)
    losses['spectral_loss'] = spectral_loss
    losses['mel_loss'] = mel_loss
    losses['perceptual_loss'] = perceptual_loss

    # TODO(synk): MusicLoss (.music module) not provided in reference; contributes 0.0.
    losses['music_loss'] = jnp.float32(0.0)

    commitment_loss = model_outputs.get('commitment_loss', jnp.float32(0.0))
    codebook_loss = model_outputs.get('codebook_loss', jnp.float32(0.0))
    losses['commitment_loss'] = commitment_loss
    losses['codebook_loss'] = codebook_loss

    # Matches the module's branch for discriminator_outputs is None -> 0.0.
    # TODO(synk): AdversarialLoss definition not provided for the non-None branch.
    losses['adversarial_loss'] = jnp.float32(0.0)

    total_loss = (time_weight * time_loss +
                  spectral_weight * spectral_loss +
                  mel_weight * mel_loss +
                  perceptual_weight * perceptual_loss +
                  music_weight * losses['music_loss'] +
                  commitment_weight * commitment_loss +
                  adversarial_weight * losses['adversarial_loss'])
    losses['total_loss'] = total_loss
    return losses


# ----------------------------------------------------------------------------
# Demo
# ----------------------------------------------------------------------------
if __name__ == "__main__":
    key = jax.random.PRNGKey(0)
    k1, k2, k3, k4 = jax.random.split(key, 4)

    B, C, T = 2, 1, 4096            # [batch, channels, time]
    original = jax.random.normal(k1, (B, C, T), dtype=jnp.float32)
    reconstructed = original + 0.05 * jax.random.normal(k2, (B, C, T),
                                                        dtype=jnp.float32)
    model_outputs = {
        'commitment_loss': jnp.abs(jax.random.normal(k3, (), dtype=jnp.float32)),
        'codebook_loss': jnp.abs(jax.random.normal(k4, (), dtype=jnp.float32)),
    }

    # Whole loss under jit so the cached NumPy basis / mel tables constant-fold.
    loss_fn = jax.jit(functools.partial(
        reconstruction_loss, sample_rate=16000, n_fft=256, hop_length=64,
        n_mels=128))
    losses = loss_fn(original, reconstructed, model_outputs)
    jax.block_until_ready(losses['total_loss'])
    print("KERNEL_OK")
</pallas_src>

<mosaic_0001>
module attributes {stable_mosaic.version = 11 : i64} {
  func.func @_stft_losses_kernel(%arg0: i32, %arg1: memref<64x256xbf16, #tpu.memory_space<vmem>>, %arg2: memref<64x256xbf16, #tpu.memory_space<vmem>>, %arg3: memref<256x256xbf16, #tpu.memory_space<vmem>>, %arg4: memref<128x128xf32, #tpu.memory_space<vmem>>, %arg5: memref<1x8x128xf32, #tpu.memory_space<vmem>>) attributes {dimension_semantics = [#tpu.dimension_semantics<parallel>], iteration_bounds = array<i64: 2>, scalar_prefetch = 0 : i64, scratch_operands = 0 : i64, tpu.core_type = #tpu.core_type<tc>, window_params = [{transform_indices = @transform_0, window_bounds = array<i64: 64, 256>}, {transform_indices = @transform_1, window_bounds = array<i64: 64, 256>}, {pipeline_mode = #tpu.pipeline_mode<synchronous>, transform_indices = @transform_2, window_bounds = array<i64: 256, 256>}, {pipeline_mode = #tpu.pipeline_mode<synchronous>, transform_indices = @transform_3, window_bounds = array<i64: 128, 128>}, {transform_indices = @transform_4, window_bounds = array<i64: 1, 8, 128>}]} {
    %c0 = arith.constant 0 : index
    %c0_0 = arith.constant 0 : index
    %0 = vector.load %arg3[%c0, %c0_0] : memref<256x256xbf16, #tpu.memory_space<vmem>>, vector<256x256xbf16>
    %c0_1 = arith.constant 0 : index
    %c0_2 = arith.constant 0 : index
    %1 = vector.load %arg1[%c0_1, %c0_2] : memref<64x256xbf16, #tpu.memory_space<vmem>>, vector<64x256xbf16>
    %cst = arith.constant dense<0.000000e+00> : vector<64x256xf32>
    %2 = tpu.matmul %1, %0, %cst {dimension_numbers = #tpu.dot_dimension_numbers<[1], [0], [0], [1], [0, 0, 1, 1], [], []>} : vector<64x256xbf16>, vector<256x256xbf16>, vector<64x256xf32> -> vector<64x256xf32>
    %c0_3 = arith.constant 0 : index
    %c0_4 = arith.constant 0 : index
    %3 = vector.load %arg2[%c0_3, %c0_4] : memref<64x256xbf16, #tpu.memory_space<vmem>>, vector<64x256xbf16>
    %cst_5 = arith.constant dense<0.000000e+00> : vector<64x256xf32>
    %4 = tpu.matmul %3, %0, %cst_5 {dimension_numbers = #tpu.dot_dimension_numbers<[1], [0], [0], [1], [0, 0, 1, 1], [], []>} : vector<64x256xbf16>, vector<256x256xbf16>, vector<64x256xf32> -> vector<64x256xf32>
    %5 = vector.extract_strided_slice %2 {offsets = [0, 0], sizes = [64, 128], strides = [1, 1]} : vector<64x256xf32> to vector<64x128xf32>
    %6 = vector.extract_strided_slice %2 {offsets = [0, 128], sizes = [64, 128], strides = [1, 1]} : vector<64x256xf32> to vector<64x128xf32>
    %7 = vector.extract_strided_slice %4 {offsets = [0, 0], sizes = [64, 128], strides = [1, 1]} : vector<64x256xf32> to vector<64x128xf32>
    %8 = vector.extract_strided_slice %4 {offsets = [0, 128], sizes = [64, 128], strides = [1, 1]} : vector<64x256xf32> to vector<64x128xf32>
    %9 = arith.mulf %5, %5 : vector<64x128xf32>
    %10 = arith.mulf %6, %6 : vector<64x128xf32>
    %11 = arith.addf %9, %10 : vector<64x128xf32>
    %cst_6 = arith.constant 9.99999996E-13 : f32
    %12 = vector.broadcast %cst_6 : f32 to vector<64x128xf32>
    %13 = arith.addf %11, %12 : vector<64x128xf32>
    %14 = math.sqrt %13 : vector<64x128xf32>
    %15 = arith.mulf %7, %7 : vector<64x128xf32>
    %16 = arith.mulf %8, %8 : vector<64x128xf32>
    %17 = arith.addf %15, %16 : vector<64x128xf32>
    %cst_7 = arith.constant 9.99999996E-13 : f32
    %18 = vector.broadcast %cst_7 : f32 to vector<64x128xf32>
    %19 = arith.addf %17, %18 : vector<64x128xf32>
    %20 = math.sqrt %19 : vector<64x128xf32>
    %cst_8 = arith.constant 9.99999993E-9 : f32
    %21 = vector.broadcast %cst_8 : f32 to vector<64x128xf32>
    %22 = arith.addf %14, %21 : vector<64x128xf32>
    %23 = math.log %22 : vector<64x128xf32>
    %cst_9 = arith.constant 9.99999993E-9 : f32
    %24 = vector.broadcast %cst_9 : f32 to vector<64x128xf32>
    %25 = arith.addf %20, %24 : vector<64x128xf32>
    %26 = math.log %25 : vector<64x128xf32>
    %27 = arith.subf %20, %14 : vector<64x128xf32>
    %28 = arith.subf %26, %23 : vector<64x128xf32>
    %29 = math.absf %27 : vector<64x128xf32>
    %30 = math.absf %28 : vector<64x128xf32>
    %31 = arith.addf %29, %30 : vector<64x128xf32>
    %32 = vector.shape_cast %31 : vector<64x128xf32> to vector<1x64x128xf32>
    %cst_10 = arith.constant dense<0.000000e+00> : vector<1xf32>
    %33 = vector.multi_reduction <add>, %32, %cst_10 [1, 2] : vector<1x64x128xf32> to vector<1xf32>
    %34 = vector.shape_cast %33 : vector<1xf32> to vector<1x1x1xf32>
    %35 = vector.extract %34[0, 0, 0] : f32 from vector<1x1x1xf32>
    %36 = arith.mulf %28, %28 : vector<64x128xf32>
    %37 = vector.shape_cast %36 : vector<64x128xf32> to vector<1x64x128xf32>
    %cst_11 = arith.constant dense<0.000000e+00> : vector<1xf32>
    %38 = vector.multi_reduction <add>, %37, %cst_11 [1, 2] : vector<1x64x128xf32> to vector<1xf32>
    %39 = vector.shape_cast %38 : vector<1xf32> to vector<1x1x1xf32>
    %40 = vector.extract %39[0, 0, 0] : f32 from vector<1x1x1xf32>
    %c0_12 = arith.constant 0 : index
    %c0_13 = arith.constant 0 : index
    %41 = vector.load %arg4[%c0_12, %c0_13] : memref<128x128xf32, #tpu.memory_space<vmem>>, vector<128x128xf32>
    %cst_14 = arith.constant dense<0.000000e+00> : vector<64x128xf32>
    %42 = tpu.matmul %14, %41, %cst_14 {dimension_numbers = #tpu.dot_dimension_numbers<[1], [0], [0], [1], [0, 0, 1, 1], [], []>} : vector<64x128xf32>, vector<128x128xf32>, vector<64x128xf32> -> vector<64x128xf32>
    %cst_15 = arith.constant dense<0.000000e+00> : vector<64x128xf32>
    %43 = tpu.matmul %20, %41, %cst_15 {dimension_numbers = #tpu.dot_dimension_numbers<[1], [0], [0], [1], [0, 0, 1, 1], [], []>} : vector<64x128xf32>, vector<128x128xf32>, vector<64x128xf32> -> vector<64x128xf32>
    %cst_16 = arith.constant 9.99999993E-9 : f32
    %44 = vector.broadcast %cst_16 : f32 to vector<64x128xf32>
    %45 = arith.addf %42, %44 : vector<64x128xf32>
    %46 = math.log %45 : vector<64x128xf32>
    %cst_17 = arith.constant 9.99999993E-9 : f32
    %47 = vector.broadcast %cst_17 : f32 to vector<64x128xf32>
    %48 = arith.addf %43, %47 : vector<64x128xf32>
    %49 = math.log %48 : vector<64x128xf32>
    %50 = arith.subf %43, %42 : vector<64x128xf32>
    %51 = math.absf %50 : vector<64x128xf32>
    %52 = arith.subf %49, %46 : vector<64x128xf32>
    %53 = math.absf %52 : vector<64x128xf32>
    %54 = arith.addf %51, %53 : vector<64x128xf32>
    %55 = vector.shape_cast %54 : vector<64x128xf32> to vector<1x64x128xf32>
    %cst_18 = arith.constant dense<0.000000e+00> : vector<1xf32>
    %56 = vector.multi_reduction <add>, %55, %cst_18 [1, 2] : vector<1x64x128xf32> to vector<1xf32>
    %57 = vector.shape_cast %56 : vector<1xf32> to vector<1x1x1xf32>
    %58 = vector.extract %57[0, 0, 0] : f32 from vector<1x1x1xf32>
    %59 = tpu.iota {dimensions = array<i32: 0>} : vector<8x128xi32>
    %60 = tpu.iota {dimensions = array<i32: 1>} : vector<8x128xi32>
    %cst_19 = arith.constant 0.000000e+00 : f32
    %61 = vector.broadcast %cst_19 : f32 to vector<8x128xf32>
    %c0_i32 = arith.constant 0 : i32
    %62 = vector.broadcast %c0_i32 : i32 to vector<8x128xi32>
    %63 = arith.cmpi eq, %59, %62 : vector<8x128xi32>
    %c0_i32_20 = arith.constant 0 : i32
    %64 = vector.broadcast %c0_i32_20 : i32 to vector<8x128xi32>
    %65 = arith.cmpi eq, %60, %64 : vector<8x128xi32>
    %66 = arith.andi %63, %65 : vector<8x128xi1>
    %cst_21 = arith.constant 0.000000e+00 : f32
    %67 = vector.broadcast %35 : f32 to vector<8x128xf32>
    %68 = vector.broadcast %cst_21 : f32 to vector<8x128xf32>
    %69 = arith.select %66, %67, %68 : vector<8x128xi1>, vector<8x128xf32>
    %70 = arith.addf %61, %69 : vector<8x128xf32>
    %c0_i32_22 = arith.constant 0 : i32
    %71 = vector.broadcast %c0_i32_22 : i32 to vector<8x128xi32>
    %72 = arith.cmpi eq, %59, %71 : vector<8x128xi32>
    %c1_i32 = arith.constant 1 : i32
    %73 = vector.broadcast %c1_i32 : i32 to vector<8x128xi32>
    %74 = arith.cmpi eq, %60, %73 : vector<8x128xi32>
    %75 = arith.andi %72, %74 : vector<8x128xi1>
    %cst_23 = arith.constant 0.000000e+00 : f32
    %76 = vector.broadcast %40 : f32 to vector<8x128xf32>
    %77 = vector.broadcast %cst_23 : f32 to vector<8x128xf32>
    %78 = arith.select %75, %76, %77 : vector<8x128xi1>, vector<8x128xf32>
    %79 = arith.addf %70, %78 : vector<8x128xf32>
    %c0_i32_24 = arith.constant 0 : i32
    %80 = vector.broadcast %c0_i32_24 : i32 to vector<8x128xi32>
    %81 = arith.cmpi eq, %59, %80 : vector<8x128xi32>
    %c2_i32 = arith.constant 2 : i32
    %82 = vector.broadcast %c2_i32 : i32 to vector<8x128xi32>
    %83 = arith.cmpi eq, %60, %82 : vector<8x128xi32>
    %84 = arith.andi %81, %83 : vector<8x128xi1>
    %cst_25 = arith.constant 0.000000e+00 : f32
    %85 = vector.broadcast %58 : f32 to vector<8x128xf32>
    %86 = vector.broadcast %cst_25 : f32 to vector<8x128xf32>
    %87 = arith.select %84, %85, %86 : vector<8x128xi1>, vector<8x128xf32>
    %88 = arith.addf %79, %87 : vector<8x128xf32>
    %89 = vector.shape_cast %88 : vector<8x128xf32> to vector<1x8x128xf32>
    %c0_26 = arith.constant 0 : index
    %c0_27 = arith.constant 0 : index
    %c0_28 = arith.constant 0 : index
    %90 = vector.load %arg5[%c0_26, %c0_27, %c0_28] : memref<1x8x128xf32, #tpu.memory_space<vmem>>, vector<1x8x128xf32>
    tpu.vector_store %arg5[%c0_26, %c0_27, %c0_28], %89 {strides = array<i32>} : memref<1x8x128xf32, #tpu.memory_space<vmem>>, vector<1x8x128xf32>,
    return
  }
  func.func @transform_0(%arg0: i32) -> (i32, i32) {
    %c0_i32 = arith.constant 0 : i32
    %c0_i32_0 = arith.constant 0 : i32
    return %arg0, %c0_i32 : i32, i32
  }
  func.func @transform_1(%arg0: i32) -> (i32, i32) {
    %c0_i32 = arith.constant 0 : i32
    %c0_i32_0 = arith.constant 0 : i32
    return %arg0, %c0_i32 : i32, i32
  }
  func.func @transform_2(%arg0: i32) -> (i32, i32) {
    %c0_i32 = arith.constant 0 : i32
    %c0_i32_0 = arith.constant 0 : i32
    %c0_i32_1 = arith.constant 0 : i32
    return %c0_i32, %c0_i32_0 : i32, i32
  }
  func.func @transform_3(%arg0: i32) -> (i32, i32) {
    %c0_i32 = arith.constant 0 : i32
    %c0_i32_0 = arith.constant 0 : i32
    %c0_i32_1 = arith.constant 0 : i32
    return %c0_i32, %c0_i32_0 : i32, i32
  }
  func.func @transform_4(%arg0: i32) -> (i32, i32, i32) {
    %c0_i32 = arith.constant 0 : i32
    %c0_i32_0 = arith.constant 0 : i32
    %c0_i32_1 = arith.constant 0 : i32
    return %arg0, %c0_i32, %c0_i32_0 : i32, i32, i32
  }
}

module attributes {stable_mosaic.version = 11 : i64} {
  func.func @_time_l1_kernel(%arg0: i32, %arg1: memref<8x1024xf32, #tpu.memory_space<vmem>>, %arg2: memref<8x1024xf32, #tpu.memory_space<vmem>>, %arg3: memref<1x8x128xf32, #tpu.memory_space<vmem>>) attributes {dimension_semantics = [#tpu.dimension_semantics<parallel>], iteration_bounds = array<i64: 1>, scalar_prefetch = 0 : i64, scratch_operands = 0 : i64, tpu.core_type = #tpu.core_type<tc>, window_params = [{transform_indices = @transform_0, window_bounds = array<i64: 8, 1024>}, {transform_indices = @transform_1, window_bounds = array<i64: 8, 1024>}, {transform_indices = @transform_2, window_bounds = array<i64: 1, 8, 128>}]} {
    %c0 = arith.constant 0 : index
    %c0_0 = arith.constant 0 : index
    %0 = vector.load %arg2[%c0, %c0_0] : memref<8x1024xf32, #tpu.memory_space<vmem>>, vector<8x1024xf32>
    %c0_1 = arith.constant 0 : index
    %c0_2 = arith.constant 0 : index
    %1 = vector.load %arg1[%c0_1, %c0_2] : memref<8x1024xf32, #tpu.memory_space<vmem>>, vector<8x1024xf32>
    %2 = arith.subf %0, %1 : vector<8x1024xf32>
    %3 = math.absf %2 : vector<8x1024xf32>
    %4 = vector.shape_cast %3 : vector<8x1024xf32> to vector<1x8x1024xf32>
    %cst = arith.constant dense<0.000000e+00> : vector<1xf32>
    %5 = vector.multi_reduction <add>, %4, %cst [1, 2] : vector<1x8x1024xf32> to vector<1xf32>
    %6 = vector.shape_cast %5 : vector<1xf32> to vector<1x1x1xf32>
    %7 = vector.extract %6[0, 0, 0] : f32 from vector<1x1x1xf32>
    %8 = tpu.iota {dimensions = array<i32: 0>} : vector<8x128xi32>
    %9 = tpu.iota {dimensions = array<i32: 1>} : vector<8x128xi32>
    %cst_3 = arith.constant 0.000000e+00 : f32
    %10 = vector.broadcast %cst_3 : f32 to vector<8x128xf32>
    %c0_i32 = arith.constant 0 : i32
    %11 = vector.broadcast %c0_i32 : i32 to vector<8x128xi32>
    %12 = arith.cmpi eq, %8, %11 : vector<8x128xi32>
    %c0_i32_4 = arith.constant 0 : i32
    %13 = vector.broadcast %c0_i32_4 : i32 to vector<8x128xi32>
    %14 = arith.cmpi eq, %9, %13 : vector<8x128xi32>
    %15 = arith.andi %12, %14 : vector<8x128xi1>
    %cst_5 = arith.constant 0.000000e+00 : f32
    %16 = vector.broadcast %7 : f32 to vector<8x128xf32>
    %17 = vector.broadcast %cst_5 : f32 to vector<8x128xf32>
    %18 = arith.select %15, %16, %17 : vector<8x128xi1>, vector<8x128xf32>
    %19 = arith.addf %10, %18 : vector<8x128xf32>
    %20 = vector.shape_cast %19 : vector<8x128xf32> to vector<1x8x128xf32>
    %c0_6 = arith.constant 0 : index
    %c0_7 = arith.constant 0 : index
    %c0_8 = arith.constant 0 : index
    %21 = vector.load %arg3[%c0_6, %c0_7, %c0_8] : memref<1x8x128xf32, #tpu.memory_space<vmem>>, vector<1x8x128xf32>
    tpu.vector_store %arg3[%c0_6, %c0_7, %c0_8], %20 {strides = array<i32>} : memref<1x8x128xf32, #tpu.memory_space<vmem>>, vector<1x8x128xf32>,
    return
  }
  func.func @transform_0(%arg0: i32) -> (i32, i32) {
    %c0_i32 = arith.constant 0 : i32
    %c0_i32_0 = arith.constant 0 : i32
    return %arg0, %c0_i32 : i32, i32
  }
  func.func @transform_1(%arg0: i32) -> (i32, i32) {
    %c0_i32 = arith.constant 0 : i32
    %c0_i32_0 = arith.constant 0 : i32
    return %arg0, %c0_i32 : i32, i32
  }
  func.func @transform_2(%arg0: i32) -> (i32, i32, i32) {
    %c0_i32 = arith.constant 0 : i32
    %c0_i32_0 = arith.constant 0 : i32
    %c0_i32_1 = arith.constant 0 : i32
    return %arg0, %c0_i32, %c0_i32_0 : i32, i32, i32
  }
}

</mosaic_0001>

<llo_original>
// kernel: reconstruction_loss.2
$region0: #{reconstruction_loss.2}
  #allocation0 [shape = 'u32[]', space=smem, size = 0x4, offset = 0x4, fixed_abs, tag = 'smem constant byte address 0x4 - core index']
  #allocation1 [shape = 'u32[72,128]{1,0:T(1,128)}', space=vmem, size = 0x9000, scoped, tag = 'internal scratch']
  %s0 = inlined_call_operand.vmem [shape: f32[8,1024], index: 0, kind: input, shape index: {}]
  %s1 = inlined_call_operand.vmem [shape: f32[8,1024], index: 1, kind: input, shape index: {}]
  %s2 = inlined_call_operand.vmem [shape: f32[1,8,128], index: 2, kind: output, shape index: {}]
  %s3 = sld [smem:[#allocation0]]
  $region18: #{reconstruction_loss.2} parent=0
    _
  %s5 = ssub.s32 1, %s3
  %s6 = scalar_select 0, %s5, %s3
  // Predicated region
  $region2: #{reconstruction_loss.2} parent=0 // pred_check
    _
  $region3: #{reconstruction_loss.2} parent=0 // pred_check_branch
    %8 = sbr.rel (0) target = $region5
  $region4: #{reconstruction_loss.2} parent=0 // pred_region
    _
  $region5: #{reconstruction_loss.2} parent=0 // pred_fallthru
    _
  // Predicated region
  $region6: #{reconstruction_loss.2} parent=0 // pred_check
    _
  $region7: #{reconstruction_loss.2} parent=0 // pred_check_branch
    %10 = sbr.rel (0) target = $region9
  $region8: #{reconstruction_loss.2} parent=0 // pred_region
    _
  $region9: #{reconstruction_loss.2} parent=0 // pred_fallthru
    _
  %v11 = vld [vmem:[%s1] sm:$0xff]
  %v12 = vld [vmem:[%s1 + $0x8] sm:$0xff]
  %v13 = vld [vmem:[%s1 + $0x10] sm:$0xff]
  %v14 = vld [vmem:[%s1 + $0x18] sm:$0xff]
  %v15 = vld [vmem:[%s1 + $0x20] sm:$0xff]
  %v16 = vld [vmem:[%s1 + $0x28] sm:$0xff]
  %v17 = vld [vmem:[%s1 + $0x30] sm:$0xff]
  %v18 = vld [vmem:[%s1 + $0x38] sm:$0xff]
  %v19 = vld [vmem:[%s0] sm:$0xff]
  %v20 = vld [vmem:[%s0 + $0x8] sm:$0xff]
  %v21 = vld [vmem:[%s0 + $0x10] sm:$0xff]
  %v22 = vld [vmem:[%s0 + $0x18] sm:$0xff]
  %v23 = vld [vmem:[%s0 + $0x20] sm:$0xff]
  %v24 = vld [vmem:[%s0 + $0x28] sm:$0xff]
  %v25 = vld [vmem:[%s0 + $0x30] sm:$0xff]
  %v26 = vld [vmem:[%s0 + $0x38] sm:$0xff]
  %v27 = vsub.f32 %v11, %v19
  %v28 = vsub.f32 %v12, %v20
  %v29 = vsub.f32 %v13, %v21
  %v30 = vsub.f32 %v14, %v22
  %v31 = vsub.f32 %v15, %v23
  %v32 = vsub.f32 %v16, %v24
  %v33 = vsub.f32 %v17, %v25
  %v34 = vsub.f32 %v18, %v26
  %v35 = vand.u32 2147483647, %v27
  %v36 = vand.u32 2147483647, %v28
  %v37 = vand.u32 2147483647, %v29
  %v38 = vand.u32 2147483647, %v30
  %v39 = vand.u32 2147483647, %v31
  %v40 = vand.u32 2147483647, %v32
  %v41 = vand.u32 2147483647, %v33
  %v42 = vand.u32 2147483647, %v34
  %v43 = vadd.f32 %v35, %v36
  %v44 = vadd.f32 %v43, %v37
  %v45 = vadd.f32 %v44, %v38
  %v46 = vadd.f32 %v45, %v39
  %v47 = vadd.f32 %v46, %v40
  %v48 = vadd.f32 %v47, %v41
  %v49 = vadd.f32 %v48, %v42
  %50 = vadd.xlane.f32.xlu0 %v49
  %v51 = vpop.xlane.xlu0 %50
  %v52 = vrot.slane %v51, 4
  %v53 = vadd.f32 %v51, %v52
  %v54 = vrot.slane %v53, 2
  %v55 = vadd.f32 %v53, %v54
  %v56 = vrot.slane %v55, 1
  %v57 = vadd.f32 %v55, %v56
  %s58 = vtos %v57
  %v59 = vlaneseq
  %v60 = vshrl.u32 %v59, 7
  %v61 = vlaneseq
  %v62 = vand.u32 %v61, 127
  %vm63 = vcmp.eq.s32.totalorder %v60, 0
  %vm64 = vcmp.eq.s32.totalorder %v62, 0
  %vm65 = vmand %vm63, %vm64
  %v66 = vstv %s58
  %v67 = vsel %vm65, %v66, 0.0
  %v68 = vadd.f32 %v67, 0.0
  %69 = vst [vmem:[%s2] sm:$0xff] %v68
  // Predicated region
  $region10: #{reconstruction_loss.2} parent=0 // pred_check
    _
  $region11: #{reconstruction_loss.2} parent=0 // pred_check_branch
    %71 = sbr.rel (0) target = $region13
  $region12: #{reconstruction_loss.2} parent=0 // pred_region
    _
  $region13: #{reconstruction_loss.2} parent=0 // pred_fallthru
    _
  // Predicated region
  $region14: #{reconstruction_loss.2} parent=0 // pred_check
    _
  $region15: #{reconstruction_loss.2} parent=0 // pred_check_branch
    %73 = sbr.rel (0) target = $region17
  $region16: #{reconstruction_loss.2} parent=0 // pred_region
    _
  $region17: #{reconstruction_loss.2} parent=0 // pred_fallthru
    _

// kernel: reconstruction_loss.3
$region0: #{reconstruction_loss.3}
  #allocation0 [shape = 'u32[]', space=smem, size = 0x4, offset = 0x4, fixed_abs, tag = 'smem constant byte address 0x4 - core index']
  #allocation1 [shape = 'u32[72,128]{1,0:T(1,128)}', space=vmem, size = 0x9000, scoped, tag = 'internal scratch']
  %s0 = inlined_call_operand.vmem [shape: bf16[128,256], index: 0, kind: input, shape index: {}]
  %s1 = inlined_call_operand.vmem [shape: bf16[128,256], index: 1, kind: input, shape index: {}]
  %s2 = inlined_call_operand.vmem [shape: bf16[256,256], index: 2, kind: input, shape index: {}]
  %s3 = inlined_call_operand.vmem [shape: f32[128,128], index: 3, kind: input, shape index: {}]
  %s4 = inlined_call_operand.vmem [shape: f32[2,8,128], index: 4, kind: output, shape index: {}]
  %s5 = sld [smem:[#allocation0]]
  $region49: #{reconstruction_loss.3} parent=0
    _
  %s7 = ssub.s32 1, %s5
  %s8 = scalar_select 0, %s7, %s5
  loop: start=0, step=1, limit=4
  $region2: #{reconstruction_loss.3} parent=0 // loop_pre_header
    _
  $region3: #{reconstruction_loss.3} parent=0 // loop_header
    %s10 = sphi 0, %s14
    %p11 = scmp.ge.s32.totalorder %s10, 4
    %s20 = sphi 0, %s22
    %s23 = sphi 0, %s20
    %s24 = sphi 0, %s23
    %s40 = sphi 0, %s24
    %s46 = sphi 0, %s48
    %s49 = sphi 0, %s46
    %s50 = sphi 0, %s49
    %s66 = sphi 0, %s50
    %s70 = sphi 0, %s70
    %s72 = sphi 0, %s70
    %s73 = sphi 0, %s72
    %s87 = sphi 0, %s73
    %s91 = sphi 0, %s91
    %s93 = sphi 0, %s91
    %s94 = sphi 0, %s93
    %s108 = sphi 0, %s94
    %s114 = sphi 0, %s116
    %s117 = sphi 0, %s114
    %s118 = sphi 0, %s117
    %s134 = sphi 0, %s118
  $region4: #{reconstruction_loss.3} parent=0 // loop_header_branch
    %13 = sbr.rel (%p11) target = $region8
  $region5: #{reconstruction_loss.3} parent=0 // loop_body
    %s15 = ssub.s32 %s10, 1
    %s16 = ssub.s32 %s10, 2
    %s17 = sadd.s32 %s10, 1
    %s18 = ssub.s32 %s10, %s17
    %p19 = scmp.eq.s32.totalorder %s18, 0
    %s21 = sadd.s32 %s20, 1
    %s22 = scalar_select %p19, %s20, %s21
    %p25 = pneg %p19
    %p26 = scmp.eq.s32.totalorder %s10, 1
    %p27 = por %p25, %p26
    %p28 = scmp.ne.s32.totalorder %s20, %s23
    %p29 = scmp.eq.s32.totalorder %s10, 0
    %p30 = por %p28, %p29
    %p31 = scmp.ne.s32.totalorder %s20, %s23
    %p32 = scmp.eq.s32.totalorder %s15, 1
    %p33 = por %p31, %p32
    %p34 = scmp.ne.s32.totalorder %s23, %s24
    %p35 = scmp.eq.s32.totalorder %s15, 0
    %p36 = por %p34, %p35
    %p37 = scmp.ne.s32.totalorder %s23, %s24
    %p38 = scmp.eq.s32.totalorder %s16, 1
    %p39 = por %p37, %p38
    %p41 = scmp.ne.s32.totalorder %s24, %s40
    %p42 = scmp.eq.s32.totalorder %s16, 0
    %p43 = por %p41, %p42
    %s44 = ssub.s32 %s10, %s17
    %p45 = scmp.eq.s32.totalorder %s44, 0
    %s47 = sadd.s32 %s46, 1
    %s48 = scalar_select %p45, %s46, %s47
    %p51 = pneg %p45
    %p52 = scmp.eq.s32.totalorder %s10, 1
    %p53 = por %p51, %p52
    %p54 = scmp.ne.s32.totalorder %s46, %s49
    %p55 = scmp.eq.s32.totalorder %s10, 0
    %p56 = por %p54, %p55
    %p57 = scmp.ne.s32.totalorder %s46, %s49
    %p58 = scmp.eq.s32.totalorder %s15, 1
    %p59 = por %p57, %p58
    %p60 = scmp.ne.s32.totalorder %s49, %s50
    %p61 = scmp.eq.s32.totalorder %s15, 0
    %p62 = por %p60, %p61
    %p63 = scmp.ne.s32.totalorder %s49, %s50
    %p64 = scmp.eq.s32.totalorder %s16, 1
    %p65 = por %p63, %p64
    %p67 = scmp.ne.s32.totalorder %s50, %s66
    %p68 = scmp.eq.s32.totalorder %s16, 0
    %p69 = por %p67, %p68
    %s71 = sadd.s32 %s70, 1
    %p74 = scmp.eq.s32.totalorder %s10, 1
    %p75 = scmp.ne.s32.totalorder %s70, %s72
    %p76 = scmp.eq.s32.totalorder %s10, 0
    %p77 = por %p75, %p76
    %p78 = scmp.ne.s32.totalorder %s70, %s72
    %p79 = scmp.eq.s32.totalorder %s15, 1
    %p80 = por %p78, %p79
    %p81 = scmp.ne.s32.totalorder %s72, %s73
    %p82 = scmp.eq.s32.totalorder %s15, 0
    %p83 = por %p81, %p82
    %p84 = scmp.ne.s32.totalorder %s72, %s73
    %p85 = scmp.eq.s32.totalorder %s16, 1
    %p86 = por %p84, %p85
    %p88 = scmp.ne.s32.totalorder %s73, %s87
    %p89 = scmp.eq.s32.totalorder %s16, 0
    %p90 = por %p88, %p89
    %s92 = sadd.s32 %s91, 1
    %p95 = scmp.eq.s32.totalorder %s10, 1
    %p96 = scmp.ne.s32.totalorder %s91, %s93
    %p97 = scmp.eq.s32.totalorder %s10, 0
    %p98 = por %p96, %p97
    %p99 = scmp.ne.s32.totalorder %s91, %s93
    %p100 = scmp.eq.s32.totalorder %s15, 1
    %p101 = por %p99, %p100
    %p102 = scmp.ne.s32.totalorder %s93, %s94
    %p103 = scmp.eq.s32.totalorder %s15, 0
    %p104 = por %p102, %p103
    %p105 = scmp.ne.s32.totalorder %s93, %s94
    %p106 = scmp.eq.s32.totalorder %s16, 1
    %p107 = por %p105, %p106
    %p109 = scmp.ne.s32.totalorder %s94, %s108
    %p110 = scmp.eq.s32.totalorder %s16, 0
    %p111 = por %p109, %p110
    %s112 = ssub.s32 %s10, %s17
    %p113 = scmp.eq.s32.totalorder %s112, 0
    %s115 = sadd.s32 %s114, 1
    %s116 = scalar_select %p113, %s114, %s115
    %p119 = pneg %p113
    %p120 = scmp.eq.s32.totalorder %s10, 1
    %p121 = por %p119, %p120
    %p122 = scmp.ne.s32.totalorder %s114, %s117
    %p123 = scmp.eq.s32.totalorder %s10, 0
    %p124 = por %p122, %p123
    %p125 = scmp.ne.s32.totalorder %s114, %s117
    %p126 = scmp.eq.s32.totalorder %s15, 1
    %p127 = por %p125, %p126
    %p128 = scmp.ne.s32.totalorder %s117, %s118
    %p129 = scmp.eq.s32.totalorder %s15, 0
    %p130 = por %p128, %p129
    %p131 = scmp.ne.s32.totalorder %s117, %s118
    %p132 = scmp.eq.s32.totalorder %s16, 1
    %p133 = por %p131, %p132
    %p135 = scmp.ne.s32.totalorder %s118, %s134
    %p136 = scmp.eq.s32.totalorder %s16, 0
    %p137 = por %p135, %p136
    %p138 = scmp.le.s32.totalorder 1, %s10
    %p139 = scmp.lt.s32.totalorder %s10, 3
    %p140 = pnand %p138, %p139
    %p141 = pneg %p140
    // Predicated region
    $region9: #{reconstruction_loss.3} parent=5 // pred_check
      _
    $region10: #{reconstruction_loss.3} parent=5 // pred_check_branch
      %143 = sbr.rel (%p140) target = $region12
    $region11: #{reconstruction_loss.3} parent=5 // pred_region
      %s144 = ssub.s32 %s10, 1
      // Predicated region
      $region13: #{reconstruction_loss.3} parent=11 // pred_check
        %p145 = pneg %p83
      $region14: #{reconstruction_loss.3} parent=11 // pred_check_branch
        %147 = sbr.rel (%p145) target = $region16
      $region15: #{reconstruction_loss.3} parent=11 // pred_region
        _
      $region16: #{reconstruction_loss.3} parent=11 // pred_fallthru
        _
      // Predicated region
      $region17: #{reconstruction_loss.3} parent=11 // pred_check
        %p148 = pneg %p104
      $region18: #{reconstruction_loss.3} parent=11 // pred_check_branch
        %150 = sbr.rel (%p148) target = $region20
      $region19: #{reconstruction_loss.3} parent=11 // pred_region
        _
      $region20: #{reconstruction_loss.3} parent=11 // pred_fallthru
        _
    $region12: #{reconstruction_loss.3} parent=5 // pred_fallthru
      _
    %p151 = scmp.lt.s32.totalorder %s10, 2
    // Predicated region
    $region21: #{reconstruction_loss.3} parent=5 // pred_check
      %p152 = pneg %p151
    $region22: #{reconstruction_loss.3} parent=5 // pred_check_branch
      %154 = sbr.rel (%p152) target = $region24
    $region23: #{reconstruction_loss.3} parent=5 // pred_region
      // Predicated region
      $region25: #{reconstruction_loss.3} parent=23 // pred_check
        %p155 = pneg %p30
      $region26: #{reconstruction_loss.3} parent=23 // pred_check_branch
        %157 = sbr.rel (%p155) target = $region28
      $region27: #{reconstruction_loss.3} parent=23 // pred_region
        %s158 = smul.u32 8, %s10
        %p159 = scmp.lt.s32.totalorder %s158, 15
        %s160 = scalar_select %p159, %s158, 15
        %s161 = smul.addr %s160, 2
        %s162 = smul.addr %s161, 4
        %s163 = scalar_lea.vmem %s0, %s162
        %s164 = smul.u32 8, %s10
      $region28: #{reconstruction_loss.3} parent=23 // pred_fallthru
        _
      // Predicated region
      $region29: #{reconstruction_loss.3} parent=23 // pred_check
        %p165 = pneg %p56
      $region30: #{reconstruction_loss.3} parent=23 // pred_check_branch
        %167 = sbr.rel (%p165) target = $region32
      $region31: #{reconstruction_loss.3} parent=23 // pred_region
        %s168 = smul.u32 8, %s10
        %p169 = scmp.lt.s32.totalorder %s168, 15
        %s170 = scalar_select %p169, %s168, 15
        %s171 = smul.addr %s170, 2
        %s172 = smul.addr %s171, 4
        %s173 = scalar_lea.vmem %s1, %s172
        %s174 = smul.u32 8, %s10
      $region32: #{reconstruction_loss.3} parent=23 // pred_fallthru
        _
    $region24: #{reconstruction_loss.3} parent=5 // pred_fallthru
      _
    %p175 = scmp.le.s32.totalorder 1, %s10
    %p176 = scmp.lt.s32.totalorder %s10, 3
    %p177 = pnand %p175, %p176
    %p178 = pneg %p177
    // Predicated region
    $region33: #{reconstruction_loss.3} parent=5 // pred_check
      _
    $region34: #{reconstruction_loss.3} parent=5 // pred_check_branch
      %180 = sbr.rel (%p177) target = $region36
    $region35: #{reconstruction_loss.3} parent=5 // pred_region
      %s181 = ssub.s32 %s10, 1
      %s182 = smul.u32 8, %s15
      %p183 = scmp.lt.s32.totalorder %s182, 15
      %s184 = scalar_select %p183, %s182, 15
      %s185 = smul.addr %s184, 2
      %s186 = smul.addr %s185, 4
      %s187 = scalar_lea.vmem %s0, %s186
      %p188 = pneg %p36
      %p189 = pneg %p33
      %s190 = smul.u32 8, %s15
      %p191 = scmp.lt.s32.totalorder %s190, 15
      %s192 = scalar_select %p191, %s190, 15
      %s193 = smul.addr %s192, 2
      %s194 = smul.addr %s193, 4
      %s195 = scalar_lea.vmem %s1, %s194
      %p196 = pneg %p62
      %p197 = pneg %p59
      %p198 = pneg %p83
      %p199 = pneg %p80
      %p200 = pneg %p104
      %p201 = pneg %p101
      %p202 = pneg %p130
      %p203 = pneg %p127
      %p204 = scmp.lt.s32.totalorder %s15, 1
      %s205 = scalar_select %p204, %s15, 1
      %s206 = smul.addr %s205, 8
      %s207 = scalar_lea.vmem %s4, %s206
      %s208 = smul.u32 8, %s15
      %p209 = scmp.lt.s32.totalorder %s208, 15
      %s210 = scalar_select %p209, %s208, 15
      %s211 = smul.addr %s210, 2
      %s212 = smul.addr %s211, 4
      %s213 = scalar_lea.vmem %s0, %s212
      %s214 = smul.u32 8, %s15
      %s215 = smul.u32 8, %s15
      %p216 = scmp.lt.s32.totalorder %s215, 15
      %s217 = scalar_select %p216, %s215, 15
      %s218 = smul.addr %s217, 2
      %s219 = smul.addr %s218, 4
      %s220 = scalar_lea.vmem %s1, %s219
      %s221 = smul.u32 8, %s15
      %p222 = scmp.lt.s32.totalorder %s15, 1
      %s223 = scalar_select %p222, %s15, 1
      %s224 = smul.addr %s223, 8
      %s225 = scalar_lea.vmem %s4, %s224
      %v226 = vld [vmem:[%s2] sm:$0xff]
      %v227 = vld [vmem:[%s2 + $0x8] sm:$0xff]
      %v228 = vld [vmem:[%s2 + $0x10] sm:$0xff]
      %v229 = vld [vmem:[%s2 + $0x18] sm:$0xff]
      %v230 = vld [vmem:[%s2 + $0x20] sm:$0xff]
      %v231 = vld [vmem:[%s2 + $0x28] sm:$0xff]
      %v232 = vld [vmem:[%s2 + $0x30] sm:$0xff]
      %v233 = vld [vmem:[%s2 + $0x38] sm:$0xff]
      %v234 = vld [vmem:[%s2 + $0x40] sm:$0xff]
      %v235 = vld [vmem:[%s2 + $0x48] sm:$0xff]
      %v236 = vld [vmem:[%s2 + $0x50] sm:$0xff]
      %v237 = vld [vmem:[%s2 + $0x58] sm:$0xff]
      %v238 = vld [vmem:[%s2 + $0x60] sm:$0xff]
      %v239 = vld [vmem:[%s2 + $0x68] sm:$0xff]
      %v240 = vld [vmem:[%s2 + $0x70] sm:$0xff]
      %v241 = vld [vmem:[%s2 + $0x78] sm:$0xff]
      %v242 = vld [vmem:[%s2 + $0x80] sm:$0xff]
      %v243 = vld [vmem:[%s2 + $0x88] sm:$0xff]
      %v244 = vld [vmem:[%s2 + $0x90] sm:$0xff]
      %v245 = vld [vmem:[%s2 + $0x98] sm:$0xff]
      %v246 = vld [vmem:[%s2 + $0xa0] sm:$0xff]
      %v247 = vld [vmem:[%s2 + $0xa8] sm:$0xff]
      %v248 = vld [vmem:[%s2 + $0xb0] sm:$0xff]
      %v249 = vld [vmem:[%s2 + $0xb8] sm:$0xff]
      %v250 = vld [vmem:[%s2 + $0xc0] sm:$0xff]
      %v251 = vld [vmem:[%s2 + $0xc8] sm:$0xff]
      %v252 = vld [vmem:[%s2 + $0xd0] sm:$0xff]
      %v253 = vld [vmem:[%s2 + $0xd8] sm:$0xff]
      %v254 = vld [vmem:[%s2 + $0xe0] sm:$0xff]
      %v255 = vld [vmem:[%s2 + $0xe8] sm:$0xff]
      %v256 = vld [vmem:[%s2 + $0xf0] sm:$0xff]
      %v257 = vld [vmem:[%s2 + $0xf8] sm:$0xff]
      %v258 = vld [vmem:[%s213] sm:$0xff]
      %v259 = vld [vmem:[%s213 + $0x8] sm:$0xff]
      %v260 = vld [vmem:[%s213 + $0x10] sm:$0xff]
      %v261 = vld [vmem:[%s213 + $0x18] sm:$0xff]
      %v262 = vld [vmem:[%s213 + $0x20] sm:$0xff]
      %v263 = vld [vmem:[%s213 + $0x28] sm:$0xff]
      %v264 = vld [vmem:[%s213 + $0x30] sm:$0xff]
      %v265 = vld [vmem:[%s213 + $0x38] sm:$0xff]
      %v274 = vunpack.c.l.b16 %v258
      %v275 = vunpack.c.h.b16 %v258
      %v276 = vunpack.c.l.b16 %v259
      %v277 = vunpack.c.h.b16 %v259
      %v278 = vunpack.c.l.b16 %v260
      %v279 = vunpack.c.h.b16 %v260
      %v280 = vunpack.c.l.b16 %v261
      %v281 = vunpack.c.h.b16 %v261
      %v282 = vunpack.c.l.b16 %v262
      %v283 = vunpack.c.h.b16 %v262
      %v284 = vunpack.c.l.b16 %v263
      %v285 = vunpack.c.h.b16 %v263
      %v286 = vunpack.c.l.b16 %v264
      %v287 = vunpack.c.h.b16 %v264
      %v288 = vunpack.c.l.b16 %v265
      %v289 = vunpack.c.h.b16 %v265
      %v290 = vpack.c.b16 %v276, %v274
      %v291 = vpack.c.b16 %v277, %v275
      %v292 = vpack.c.b16 %v280, %v278
      %v293 = vpack.c.b16 %v281, %v279
      %v294 = vpack.c.b16 %v284, %v282
      %v295 = vpack.c.b16 %v285, %v283
      %v296 = vpack.c.b16 %v288, %v286
      %v297 = vpack.c.b16 %v289, %v287
      %v338 = vunpack.c.l.b16 %v226
      %v339 = vunpack.c.h.b16 %v226
      %v340 = vunpack.c.l.b16 %v227
      %v341 = vunpack.c.h.b16 %v227
      %v342 = vunpack.c.l.b16 %v228
      %v343 = vunpack.c.h.b16 %v228
      %v344 = vunpack.c.l.b16 %v229
      %v345 = vunpack.c.h.b16 %v229
      %v346 = vunpack.c.l.b16 %v230
      %v347 = vunpack.c.h.b16 %v230
      %v348 = vunpack.c.l.b16 %v231
      %v349 = vunpack.c.h.b16 %v231
      %v350 = vunpack.c.l.b16 %v232
      %v351 = vunpack.c.h.b16 %v232
      %v352 = vunpack.c.l.b16 %v233
      %v353 = vunpack.c.h.b16 %v233
      %v354 = vunpack.c.l.b16 %v234
      %v355 = vunpack.c.h.b16 %v234
      %v356 = vunpack.c.l.b16 %v235
      %v357 = vunpack.c.h.b16 %v235
      %v358 = vunpack.c.l.b16 %v236
      %v359 = vunpack.c.h.b16 %v236
      %v360 = vunpack.c.l.b16 %v237
      %v361 = vunpack.c.h.b16 %v237
      %v362 = vunpack.c.l.b16 %v238
      %v363 = vunpack.c.h.b16 %v238
      %v364 = vunpack.c.l.b16 %v239
      %v365 = vunpack.c.h.b16 %v239
      %v366 = vunpack.c.l.b16 %v240
      %v367 = vunpack.c.h.b16 %v240
      %v368 = vunpack.c.l.b16 %v241
      %v369 = vunpack.c.h.b16 %v241
      %v370 = vunpack.c.l.b16 %v242
      %v371 = vunpack.c.h.b16 %v242
      %v372 = vunpack.c.l.b16 %v243
      %v373 = vunpack.c.h.b16 %v243
      %v374 = vunpack.c.l.b16 %v244
      %v375 = vunpack.c.h.b16 %v244
      %v376 = vunpack.c.l.b16 %v245
      %v377 = vunpack.c.h.b16 %v245
      %v378 = vunpack.c.l.b16 %v246
      %v379 = vunpack.c.h.b16 %v246
      %v380 = vunpack.c.l.b16 %v247
      %v381 = vunpack.c.h.b16 %v247
      %v382 = vunpack.c.l.b16 %v248
      %v383 = vunpack.c.h.b16 %v248
      %v384 = vunpack.c.l.b16 %v249
      %v385 = vunpack.c.h.b16 %v249
      %v386 = vunpack.c.l.b16 %v250
      %v387 = vunpack.c.h.b16 %v250
      %v388 = vunpack.c.l.b16 %v251
      %v389 = vunpack.c.h.b16 %v251
      %v390 = vunpack.c.l.b16 %v252
      %v391 = vunpack.c.h.b16 %v252
      %v392 = vunpack.c.l.b16 %v253
      %v393 = vunpack.c.h.b16 %v253
      %v394 = vunpack.c.l.b16 %v254
      %v395 = vunpack.c.h.b16 %v254
      %v396 = vunpack.c.l.b16 %v255
      %v397 = vunpack.c.h.b16 %v255
      %v398 = vunpack.c.l.b16 %v256
      %v399 = vunpack.c.h.b16 %v256
      %v400 = vunpack.c.l.b16 %v257
      %v401 = vunpack.c.h.b16 %v257
      %v402 = vpack.c.b16 %v340, %v338
      %v403 = vpack.c.b16 %v341, %v339
      %v404 = vpack.c.b16 %v344, %v342
      %v405 = vpack.c.b16 %v345, %v343
      %v406 = vpack.c.b16 %v348, %v346
      %v407 = vpack.c.b16 %v349, %v347
      %v408 = vpack.c.b16 %v352, %v350
      %v409 = vpack.c.b16 %v353, %v351
      %v410 = vpack.c.b16 %v356, %v354
      %v411 = vpack.c.b16 %v357, %v355
      %v412 = vpack.c.b16 %v360, %v358
      %v413 = vpack.c.b16 %v361, %v359
      %v414 = vpack.c.b16 %v364, %v362
      %v415 = vpack.c.b16 %v365, %v363
      %v416 = vpack.c.b16 %v368, %v366
      %v417 = vpack.c.b16 %v369, %v367
      %v418 = vpack.c.b16 %v372, %v370
      %v419 = vpack.c.b16 %v373, %v371
      %v420 = vpack.c.b16 %v376, %v374
      %v421 = vpack.c.b16 %v377, %v375
      %v422 = vpack.c.b16 %v380, %v378
      %v423 = vpack.c.b16 %v381, %v379
      %v424 = vpack.c.b16 %v384, %v382
      %v425 = vpack.c.b16 %v385, %v383
      %v426 = vpack.c.b16 %v388, %v386
      %v427 = vpack.c.b16 %v389, %v387
      %v428 = vpack.c.b16 %v392, %v390
      %v429 = vpack.c.b16 %v393, %v391
      %v430 = vpack.c.b16 %v396, %v394
      %v431 = vpack.c.b16 %v397, %v395
      %v432 = vpack.c.b16 %v400, %v398
      %v433 = vpack.c.b16 %v401, %v399
      %466 = vmatpush.bf16.msra.mxu0 %v416
      %467 = vmatpush.bf16.msra.mxu0 %v414
      %468 = vmatpush.bf16.msra.mxu0 %v412
      %469 = vmatpush.bf16.msra.mxu0 %v410
      %470 = vmatpush.bf16.msra.mxu0 %v408
      %471 = vmatpush.bf16.msra.mxu0 %v406
      %472 = vmatpush.bf16.msra.mxu0 %v404
      %473 = vmatpush.bf16.msra.mxu0 %v402
      %474 = vmatmul.bf16.gmra.mxu0 %v290
      %v475 = vpop.f32.mrf.mxu0
      %v476 = vadd.f32 0.0, %v475
      %v477 = vpop.f32.mrf.mxu0
      %v478 = vadd.f32 0.0, %v477
      %479 = vmatmul.bf16.gmra.mxu0 %v292
      %v480 = vpop.f32.mrf.mxu0
      %v481 = vadd.f32 0.0, %v480
      %v482 = vpop.f32.mrf.mxu0
      %v483 = vadd.f32 0.0, %v482
      %484 = vmatmul.bf16.gmra.mxu0 %v294
      %v485 = vpop.f32.mrf.mxu0
      %v486 = vadd.f32 0.0, %v485
      %v487 = vpop.f32.mrf.mxu0
      %v488 = vadd.f32 0.0, %v487
      %489 = vmatmul.bf16.gmra.mxu0 %v296
      %v490 = vpop.f32.mrf.mxu0
      %v491 = vadd.f32 0.0, %v490
      %v492 = vpop.f32.mrf.mxu0
      %v493 = vadd.f32 0.0, %v492
      %494 = vdwg.mxu0
      %495 = vmatpush.bf16.msra.mxu0 %v432
      %496 = vmatpush.bf16.msra.mxu0 %v430
      %497 = vmatpush.bf16.msra.mxu0 %v428
      %498 = vmatpush.bf16.msra.mxu0 %v426
      %499 = vmatpush.bf16.msra.mxu0 %v424
      %500 = vmatpush.bf16.msra.mxu0 %v422
      %501 = vmatpush.bf16.msra.mxu0 %v420
      %502 = vmatpush.bf16.msra.mxu0 %v418
      %503 = vmatmul.bf16.gmra.mxu0 %v291
      %v504 = vpop.f32.mrf.mxu0
      %v505 = vadd.f32 %v476, %v504
      %v506 = vpop.f32.mrf.mxu0
      %v507 = vadd.f32 %v478, %v506
      %508 = vmatmul.bf16.gmra.mxu0 %v293
      %v509 = vpop.f32.mrf.mxu0
      %v510 = vadd.f32 %v481, %v509
      %v511 = vpop.f32.mrf.mxu0
      %v512 = vadd.f32 %v483, %v511
      %513 = vmatmul.bf16.gmra.mxu0 %v295
      %v514 = vpop.f32.mrf.mxu0
      %v515 = vadd.f32 %v486, %v514
      %v516 = vpop.f32.mrf.mxu0
      %v517 = vadd.f32 %v488, %v516
      %518 = vmatmul.bf16.gmra.mxu0 %v297
      %v519 = vpop.f32.mrf.mxu0
      %v520 = vadd.f32 %v491, %v519
      %v521 = vpop.f32.mrf.mxu0
      %v522 = vadd.f32 %v493, %v521
      %523 = vdwg.mxu0
      %524 = vmatpush.bf16.msra.mxu0 %v417
      %525 = vmatpush.bf16.msra.mxu0 %v415
      %526 = vmatpush.bf16.msra.mxu0 %v413
      %527 = vmatpush.bf16.msra.mxu0 %v411
      %528 = vmatpush.bf16.msra.mxu0 %v409
      %529 = vmatpush.bf16.msra.mxu0 %v407
      %530 = vmatpush.bf16.msra.mxu0 %v405
      %531 = vmatpush.bf16.msra.mxu0 %v403
      %532 = vmatmul.bf16.gmra.mxu0 %v290
      %v533 = vpop.f32.mrf.mxu0
      %v534 = vadd.f32 0.0, %v533
      %v535 = vpop.f32.mrf.mxu0
      %v536 = vadd.f32 0.0, %v535
      %537 = vmatmul.bf16.gmra.mxu0 %v292
      %v538 = vpop.f32.mrf.mxu0
      %v539 = vadd.f32 0.0, %v538
      %v540 = vpop.f32.mrf.mxu0
      %v541 = vadd.f32 0.0, %v540
      %542 = vmatmul.bf16.gmra.mxu0 %v294
      %v543 = vpop.f32.mrf.mxu0
      %v544 = vadd.f32 0.0, %v543
      %v545 = vpop.f32.mrf.mxu0
      %v546 = vadd.f32 0.0, %v545
      %547 = vmatmul.bf16.gmra.mxu0 %v296
      %v548 = vpop.f32.mrf.mxu0
      %v549 = vadd.f32 0.0, %v548
      %v550 = vpop.f32.mrf.mxu0
      %v551 = vadd.f32 0.0, %v550
      %552 = vdwg.mxu0
      %553 = vmatpush.bf16.msra.mxu0 %v433
      %554 = vmatpush.bf16.msra.mxu0 %v431
      %555 = vmatpush.bf16.msra.mxu0 %v429
      %556 = vmatpush.bf16.msra.mxu0 %v427
      %557 = vmatpush.bf16.msra.mxu0 %v425
      %558 = vmatpush.bf16.msra.mxu0 %v423
      %559 = vmatpush.bf16.msra.mxu0 %v421
      %560 = vmatpush.bf16.msra.mxu0 %v419
      %561 = vmatmul.bf16.gmra.mxu0 %v291
      %v562 = vpop.f32.mrf.mxu0
      %v563 = vadd.f32 %v534, %v562
      %v564 = vpop.f32.mrf.mxu0
      %v565 = vadd.f32 %v536, %v564
      %566 = vmatmul.bf16.gmra.mxu0 %v293
      %v567 = vpop.f32.mrf.mxu0
      %v568 = vadd.f32 %v539, %v567
      %v569 = vpop.f32.mrf.mxu0
      %v570 = vadd.f32 %v541, %v569
      %571 = vmatmul.bf16.gmra.mxu0 %v295
      %v572 = vpop.f32.mrf.mxu0
      %v573 = vadd.f32 %v544, %v572
      %v574 = vpop.f32.mrf.mxu0
      %v575 = vadd.f32 %v546, %v574
      %576 = vmatmul.bf16.gmra.mxu0 %v297
      %v577 = vpop.f32.mrf.mxu0
      %v578 = vadd.f32 %v549, %v577
      %v579 = vpop.f32.mrf.mxu0
      %v580 = vadd.f32 %v551, %v579
      %581 = vdwg.mxu0
      %v582 = vld [vmem:[%s220] sm:$0xff]
      %v583 = vld [vmem:[%s220 + $0x8] sm:$0xff]
      %v584 = vld [vmem:[%s220 + $0x10] sm:$0xff]
      %v585 = vld [vmem:[%s220 + $0x18] sm:$0xff]
      %v586 = vld [vmem:[%s220 + $0x20] sm:$0xff]
      %v587 = vld [vmem:[%s220 + $0x28] sm:$0xff]
      %v588 = vld [vmem:[%s220 + $0x30] sm:$0xff]
      %v589 = vld [vmem:[%s220 + $0x38] sm:$0xff]
      %v598 = vunpack.c.l.b16 %v582
      %v599 = vunpack.c.h.b16 %v582
      %v600 = vunpack.c.l.b16 %v583
      %v601 = vunpack.c.h.b16 %v583
      %v602 = vunpack.c.l.b16 %v584
      %v603 = vunpack.c.h.b16 %v584
      %v604 = vunpack.c.l.b16 %v585
      %v605 = vunpack.c.h.b16 %v585
      %v606 = vunpack.c.l.b16 %v586
      %v607 = vunpack.c.h.b16 %v586
      %v608 = vunpack.c.l.b16 %v587
      %v609 = vunpack.c.h.b16 %v587
      %v610 = vunpack.c.l.b16 %v588
      %v611 = vunpack.c.h.b16 %v588
      %v612 = vunpack.c.l.b16 %v589
      %v613 = vunpack.c.h.b16 %v589
      %v614 = vpack.c.b16 %v600, %v598
      %v615 = vpack.c.b16 %v601, %v599
      %v616 = vpack.c.b16 %v604, %v602
      %v617 = vpack.c.b16 %v605, %v603
      %v618 = vpack.c.b16 %v608, %v606
      %v619 = vpack.c.b16 %v609, %v607
      %v620 = vpack.c.b16 %v612, %v610
      %v621 = vpack.c.b16 %v613, %v611
      %630 = vmatpush.bf16.msra.mxu0 %v416
      %631 = vmatpush.bf16.msra.mxu0 %v414
      %632 = vmatpush.bf16.msra.mxu0 %v412
      %633 = vmatpush.bf16.msra.mxu0 %v410
      %634 = vmatpush.bf16.msra.mxu0 %v408
      %635 = vmatpush.bf16.msra.mxu0 %v406
      %636 = vmatpush.bf16.msra.mxu0 %v404
      %637 = vmatpush.bf16.msra.mxu0 %v402
      %638 = vmatmul.bf16.gmra.mxu0 %v614
      %v639 = vpop.f32.mrf.mxu0
      %v640 = vadd.f32 0.0, %v639
      %v641 = vpop.f32.mrf.mxu0
      %v642 = vadd.f32 0.0, %v641
      %643 = vmatmul.bf16.gmra.mxu0 %v616
      %v644 = vpop.f32.mrf.mxu0
      %v645 = vadd.f32 0.0, %v644
      %v646 = vpop.f32.mrf.mxu0
      %v647 = vadd.f32 0.0, %v646
      %648 = vmatmul.bf16.gmra.mxu0 %v618
      %v649 = vpop.f32.mrf.mxu0
      %v650 = vadd.f32 0.0, %v649
      %v651 = vpop.f32.mrf.mxu0
      %v652 = vadd.f32 0.0, %v651
      %653 = vmatmul.bf16.gmra.mxu0 %v620
      %v654 = vpop.f32.mrf.mxu0
      %v655 = vadd.f32 0.0, %v654
      %v656 = vpop.f32.mrf.mxu0
      %v657 = vadd.f32 0.0, %v656
      %658 = vdwg.mxu0
      %659 = vmatpush.bf16.msra.mxu0 %v432
      %660 = vmatpush.bf16.msra.mxu0 %v430
      %661 = vmatpush.bf16.msra.mxu0 %v428
      %662 = vmatpush.bf16.msra.mxu0 %v426
      %663 = vmatpush.bf16.msra.mxu0 %v424
      %664 = vmatpush.bf16.msra.mxu0 %v422
      %665 = vmatpush.bf16.msra.mxu0 %v420
      %666 = vmatpush.bf16.msra.mxu0 %v418
      %667 = vmatmul.bf16.gmra.mxu0 %v615
      %v668 = vpop.f32.mrf.mxu0
      %v669 = vadd.f32 %v640, %v668
      %v670 = vpop.f32.mrf.mxu0
      %v671 = vadd.f32 %v642, %v670
      %672 = vmatmul.bf16.gmra.mxu0 %v617
      %v673 = vpop.f32.mrf.mxu0
      %v674 = vadd.f32 %v645, %v673
      %v675 = vpop.f32.mrf.mxu0
      %v676 = vadd.f32 %v647, %v675
      %677 = vmatmul.bf16.gmra.mxu0 %v619
      %v678 = vpop.f32.mrf.mxu0
      %v679 = vadd.f32 %v650, %v678
      %v680 = vpop.f32.mrf.mxu0
      %v681 = vadd.f32 %v652, %v680
      %682 = vmatmul.bf16.gmra.mxu0 %v621
      %v683 = vpop.f32.mrf.mxu0
      %v684 = vadd.f32 %v655, %v683
      %v685 = vpop.f32.mrf.mxu0
      %v686 = vadd.f32 %v657, %v685
      %687 = vdwg.mxu0
      %688 = vmatpush.bf16.msra.mxu0 %v417
      %689 = vmatpush.bf16.msra.mxu0 %v415
      %690 = vmatpush.bf16.msra.mxu0 %v413
      %691 = vmatpush.bf16.msra.mxu0 %v411
      %692 = vmatpush.bf16.msra.mxu0 %v409
      %693 = vmatpush.bf16.msra.mxu0 %v407
      %694 = vmatpush.bf16.msra.mxu0 %v405
      %695 = vmatpush.bf16.msra.mxu0 %v403
      %696 = vmatmul.bf16.gmra.mxu0 %v614
      %v697 = vpop.f32.mrf.mxu0
      %v698 = vadd.f32 0.0, %v697
      %v699 = vpop.f32.mrf.mxu0
      %v700 = vadd.f32 0.0, %v699
      %701 = vmatmul.bf16.gmra.mxu0 %v616
      %v702 = vpop.f32.mrf.mxu0
      %v703 = vadd.f32 0.0, %v702
      %v704 = vpop.f32.mrf.mxu0
      %v705 = vadd.f32 0.0, %v704
      %706 = vmatmul.bf16.gmra.mxu0 %v618
      %v707 = vpop.f32.mrf.mxu0
      %v708 = vadd.f32 0.0, %v707
      %v709 = vpop.f32.mrf.mxu0
      %v710 = vadd.f32 0.0, %v709
      %711 = vmatmul.bf16.gmra.mxu0 %v620
      %v712 = vpop.f32.mrf.mxu0
      %v713 = vadd.f32 0.0, %v712
      %v714 = vpop.f32.mrf.mxu0
      %v715 = vadd.f32 0.0, %v714
      %716 = vdwg.mxu0
      %717 = vmatpush.bf16.msra.mxu0 %v433
      %718 = vmatpush.bf16.msra.mxu0 %v431
      %719 = vmatpush.bf16.msra.mxu0 %v429
      %720 = vmatpush.bf16.msra.mxu0 %v427
      %721 = vmatpush.bf16.msra.mxu0 %v425
      %722 = vmatpush.bf16.msra.mxu0 %v423
      %723 = vmatpush.bf16.msra.mxu0 %v421
      %724 = vmatpush.bf16.msra.mxu0 %v419
      %725 = vmatmul.bf16.gmra.mxu0 %v615
      %v726 = vpop.f32.mrf.mxu0
      %v727 = vadd.f32 %v698, %v726
      %v728 = vpop.f32.mrf.mxu0
      %v729 = vadd.f32 %v700, %v728
      %730 = vmatmul.bf16.gmra.mxu0 %v617
      %v731 = vpop.f32.mrf.mxu0
      %v732 = vadd.f32 %v703, %v731
      %v733 = vpop.f32.mrf.mxu0
      %v734 = vadd.f32 %v705, %v733
      %735 = vmatmul.bf16.gmra.mxu0 %v619
      %v736 = vpop.f32.mrf.mxu0
      %v737 = vadd.f32 %v708, %v736
      %v738 = vpop.f32.mrf.mxu0
      %v739 = vadd.f32 %v710, %v738
      %740 = vmatmul.bf16.gmra.mxu0 %v621
      %v741 = vpop.f32.mrf.mxu0
      %v742 = vadd.f32 %v713, %v741
      %v743 = vpop.f32.mrf.mxu0
      %v744 = vadd.f32 %v715, %v743
      %745 = vdwg.mxu0
      %v746 = vmul.f32 %v505, %v505
      %v747 = vmul.f32 %v507, %v507
      %v748 = vmul.f32 %v510, %v510
      %v749 = vmul.f32 %v512, %v512
      %v750 = vmul.f32 %v515, %v515
      %v751 = vmul.f32 %v517, %v517
      %v752 = vmul.f32 %v520, %v520
      %v753 = vmul.f32 %v522, %v522
      %v754 = vmul.f32 %v563, %v563
      %v755 = vmul.f32 %v565, %v565
      %v756 = vmul.f32 %v568, %v568
      %v757 = vmul.f32 %v570, %v570
      %v758 = vmul.f32 %v573, %v573
      %v759 = vmul.f32 %v575, %v575
      %v760 = vmul.f32 %v578, %v578
      %v761 = vmul.f32 %v580, %v580
      %v762 = vadd.f32 %v746, %v754
      %v763 = vadd.f32 %v747, %v755
      %v764 = vadd.f32 %v748, %v756
      %v765 = vadd.f32 %v749, %v757
      %v766 = vadd.f32 %v750, %v758
      %v767 = vadd.f32 %v751, %v759
      %v768 = vadd.f32 %v752, %v760
      %v769 = vadd.f32 %v753, %v761
      %v770 = vadd.f32 %v762, 1e-12
      %v771 = vadd.f32 %v763, 1e-12
      %v772 = vadd.f32 %v764, 1e-12
      %v773 = vadd.f32 %v765, 1e-12
      %v774 = vadd.f32 %v766, 1e-12
      %v775 = vadd.f32 %v767, 1e-12
      %v776 = vadd.f32 %v768, 1e-12
      %v777 = vadd.f32 %v769, 1e-12
      %v778 = vrsqrt.pop %v770
      %v779 = vmul.f32 %v778, %v770
      %v780 = vmul.f32 %v779, %v778
      %v781 = vmul.f32 0.5, %v780
      %v782 = vsub.f32 1.5, %v781
      %v783 = vmul.f32 %v778, %v782
      %v784 = vmul.f32 %v770, %v783
      %vm785 = vcmp.eq.f32.partialorder %v770, inf
      %v786 = vsel %vm785, %v770, %v784
      %vm787 = vcmp.eq.f32.partialorder %v770, 0.0
      %v788 = vand.u32 %v770, 2147483648
      %v789 = vsel %vm787, %v788, %v786
      %v790 = vrsqrt.pop %v771
      %v791 = vmul.f32 %v790, %v771
      %v792 = vmul.f32 %v791, %v790
      %v793 = vmul.f32 0.5, %v792
      %v794 = vsub.f32 1.5, %v793
      %v795 = vmul.f32 %v790, %v794
      %v796 = vmul.f32 %v771, %v795
      %vm797 = vcmp.eq.f32.partialorder %v771, inf
      %v798 = vsel %vm797, %v771, %v796
      %vm799 = vcmp.eq.f32.partialorder %v771, 0.0
      %v800 = vand.u32 %v771, 2147483648
      %v801 = vsel %vm799, %v800, %v798
      %v802 = vrsqrt.pop %v772
      %v803 = vmul.f32 %v802, %v772
      %v804 = vmul.f32 %v803, %v802
      %v805 = vmul.f32 0.5, %v804
      %v806 = vsub.f32 1.5, %v805
      %v807 = vmul.f32 %v802, %v806
      %v808 = vmul.f32 %v772, %v807
      %vm809 = vcmp.eq.f32.partialorder %v772, inf
      %v810 = vsel %vm809, %v772, %v808
      %vm811 = vcmp.eq.f32.partialorder %v772, 0.0
      %v812 = vand.u32 %v772, 2147483648
      %v813 = vsel %vm811, %v812, %v810
      %v814 = vrsqrt.pop %v773
      %v815 = vmul.f32 %v814, %v773
      %v816 = vmul.f32 %v815, %v814
      %v817 = vmul.f32 0.5, %v816
      %v818 = vsub.f32 1.5, %v817
      %v819 = vmul.f32 %v814, %v818
      %v820 = vmul.f32 %v773, %v819
      %vm821 = vcmp.eq.f32.partialorder %v773, inf
      %v822 = vsel %vm821, %v773, %v820
      %vm823 = vcmp.eq.f32.partialorder %v773, 0.0
      %v824 = vand.u32 %v773, 2147483648
      %v825 = vsel %vm823, %v824, %v822
      %v826 = vrsqrt.pop %v774
      %v827 = vmul.f32 %v826, %v774
      %v828 = vmul.f32 %v827, %v826
      %v829 = vmul.f32 0.5, %v828
      %v830 = vsub.f32 1.5, %v829
      %v831 = vmul.f32 %v826, %v830
      %v832 = vmul.f32 %v774, %v831
      %vm833 = vcmp.eq.f32.partialorder %v774, inf
      %v834 = vsel %vm833, %v774, %v832
      %vm835 = vcmp.eq.f32.partialorder %v774, 0.0
      %v836 = vand.u32 %v774, 2147483648
      %v837 = vsel %vm835, %v836, %v834
      %v838 = vrsqrt.pop %v775
      %v839 = vmul.f32 %v838, %v775
      %v840 = vmul.f32 %v839, %v838
      %v841 = vmul.f32 0.5, %v840
      %v842 = vsub.f32 1.5, %v841
      %v843 = vmul.f32 %v838, %v842
      %v844 = vmul.f32 %v775, %v843
      %vm845 = vcmp.eq.f32.partialorder %v775, inf
      %v846 = vsel %vm845, %v775, %v844
      %vm847 = vcmp.eq.f32.partialorder %v775, 0.0
      %v848 = vand.u32 %v775, 2147483648
      %v849 = vsel %vm847, %v848, %v846
      %v850 = vrsqrt.pop %v776
      %v851 = vmul.f32 %v850, %v776
      %v852 = vmul.f32 %v851, %v850
      %v853 = vmul.f32 0.5, %v852
      %v854 = vsub.f32 1.5, %v853
      %v855 = vmul.f32 %v850, %v854
      %v856 = vmul.f32 %v776, %v855
      %vm857 = vcmp.eq.f32.partialorder %v776, inf
      %v858 = vsel %vm857, %v776, %v856
      %vm859 = vcmp.eq.f32.partialorder %v776, 0.0
      %v860 = vand.u32 %v776, 2147483648
      %v861 = vsel %vm859, %v860, %v858
      %v862 = vrsqrt.pop %v777
      %v863 = vmul.f32 %v862, %v777
      %v864 = vmul.f32 %v863, %v862
      %v865 = vmul.f32 0.5, %v864
      %v866 = vsub.f32 1.5, %v865
      %v867 = vmul.f32 %v862, %v866
      %v868 = vmul.f32 %v777, %v867
      %vm869 = vcmp.eq.f32.partialorder %v777, inf
      %v870 = vsel %vm869, %v777, %v868
      %vm871 = vcmp.eq.f32.partialorder %v777, 0.0
      %v872 = vand.u32 %v777, 2147483648
      %v873 = vsel %vm871, %v872, %v870
      %v874 = vmul.f32 %v669, %v669
      %v875 = vmul.f32 %v671, %v671
      %v876 = vmul.f32 %v674, %v674
      %v877 = vmul.f32 %v676, %v676
      %v878 = vmul.f32 %v679, %v679
      %v879 = vmul.f32 %v681, %v681
      %v880 = vmul.f32 %v684, %v684
      %v881 = vmul.f32 %v686, %v686
      %v882 = vmul.f32 %v727, %v727
      %v883 = vmul.f32 %v729, %v729
      %v884 = vmul.f32 %v732, %v732
      %v885 = vmul.f32 %v734, %v734
      %v886 = vmul.f32 %v737, %v737
      %v887 = vmul.f32 %v739, %v739
      %v888 = vmul.f32 %v742, %v742
      %v889 = vmul.f32 %v744, %v744
      %v890 = vadd.f32 %v874, %v882
      %v891 = vadd.f32 %v875, %v883
      %v892 = vadd.f32 %v876, %v884
      %v893 = vadd.f32 %v877, %v885
      %v894 = vadd.f32 %v878, %v886
      %v895 = vadd.f32 %v879, %v887
      %v896 = vadd.f32 %v880, %v888
      %v897 = vadd.f32 %v881, %v889
      %v898 = vadd.f32 %v890, 1e-12
      %v899 = vadd.f32 %v891, 1e-12
      %v900 = vadd.f32 %v892, 1e-12
      %v901 = vadd.f32 %v893, 1e-12
      %v902 = vadd.f32 %v894, 1e-12
      %v903 = vadd.f32 %v895, 1e-12
      %v904 = vadd.f32 %v896, 1e-12
      %v905 = vadd.f32 %v897, 1e-12
      %v906 = vrsqrt.pop %v898
      %v907 = vmul.f32 %v906, %v898
      %v908 = vmul.f32 %v907, %v906
      %v909 = vmul.f32 0.5, %v908
      %v910 = vsub.f32 1.5, %v909
      %v911 = vmul.f32 %v906, %v910
      %v912 = vmul.f32 %v898, %v911
      %vm913 = vcmp.eq.f32.partialorder %v898, inf
      %v914 = vsel %vm913, %v898, %v912
      %vm915 = vcmp.eq.f32.partialorder %v898, 0.0
      %v916 = vand.u32 %v898, 2147483648
      %v917 = vsel %vm915, %v916, %v914
      %v918 = vrsqrt.pop %v899
      %v919 = vmul.f32 %v918, %v899
      %v920 = vmul.f32 %v919, %v918
      %v921 = vmul.f32 0.5, %v920
      %v922 = vsub.f32 1.5, %v921
      %v923 = vmul.f32 %v918, %v922
      %v924 = vmul.f32 %v899, %v923
      %vm925 = vcmp.eq.f32.partialorder %v899, inf
      %v926 = vsel %vm925, %v899, %v924
      %vm927 = vcmp.eq.f32.partialorder %v899, 0.0
      %v928 = vand.u32 %v899, 2147483648
      %v929 = vsel %vm927, %v928, %v926
      %v930 = vrsqrt.pop %v900
      %v931 = vmul.f32 %v930, %v900
      %v932 = vmul.f32 %v931, %v930
      %v933 = vmul.f32 0.5, %v932
      %v934 = vsub.f32 1.5, %v933
      %v935 = vmul.f32 %v930, %v934
      %v936 = vmul.f32 %v900, %v935
      %vm937 = vcmp.eq.f32.partialorder %v900, inf
      %v938 = vsel %vm937, %v900, %v936
      %vm939 = vcmp.eq.f32.partialorder %v900, 0.0
      %v940 = vand.u32 %v900, 2147483648
      %v941 = vsel %vm939, %v940, %v938
      %v942 = vrsqrt.pop %v901
      %v943 = vmul.f32 %v942, %v901
      %v944 = vmul.f32 %v943, %v942
      %v945 = vmul.f32 0.5, %v944
      %v946 = vsub.f32 1.5, %v945
      %v947 = vmul.f32 %v942, %v946
      %v948 = vmul.f32 %v901, %v947
      %vm949 = vcmp.eq.f32.partialorder %v901, inf
      %v950 = vsel %vm949, %v901, %v948
      %vm951 = vcmp.eq.f32.partialorder %v901, 0.0
      %v952 = vand.u32 %v901, 2147483648
      %v953 = vsel %vm951, %v952, %v950
      %v954 = vrsqrt.pop %v902
      %v955 = vmul.f32 %v954, %v902
      %v956 = vmul.f32 %v955, %v954
      %v957 = vmul.f32 0.5, %v956
      %v958 = vsub.f32 1.5, %v957
      %v959 = vmul.f32 %v954, %v958
      %v960 = vmul.f32 %v902, %v959
      %vm961 = vcmp.eq.f32.partialorder %v902, inf
      %v962 = vsel %vm961, %v902, %v960
      %vm963 = vcmp.eq.f32.partialorder %v902, 0.0
      %v964 = vand.u32 %v902, 2147483648
      %v965 = vsel %vm963, %v964, %v962
      %v966 = vrsqrt.pop %v903
      %v967 = vmul.f32 %v966, %v903
      %v968 = vmul.f32 %v967, %v966
      %v969 = vmul.f32 0.5, %v968
      %v970 = vsub.f32 1.5, %v969
      %v971 = vmul.f32 %v966, %v970
      %v972 = vmul.f32 %v903, %v971
      %vm973 = vcmp.eq.f32.partialorder %v903, inf
      %v974 = vsel %vm973, %v903, %v972
      %vm975 = vcmp.eq.f32.partialorder %v903, 0.0
      %v976 = vand.u32 %v903, 2147483648
      %v977 = vsel %vm975, %v976, %v974
      %v978 = vrsqrt.pop %v904
      %v979 = vmul.f32 %v978, %v904
      %v980 = vmul.f32 %v979, %v978
      %v981 = vmul.f32 0.5, %v980
      %v982 = vsub.f32 1.5, %v981
      %v983 = vmul.f32 %v978, %v982
      %v984 = vmul.f32 %v904, %v983
      %vm985 = vcmp.eq.f32.partialorder %v904, inf
      %v986 = vsel %vm985, %v904, %v984
      %vm987 = vcmp.eq.f32.partialorder %v904, 0.0
      %v988 = vand.u32 %v904, 2147483648
      %v989 = vsel %vm987, %v988, %v986
      %v990 = vrsqrt.pop %v905
      %v991 = vmul.f32 %v990, %v905
      %v992 = vmul.f32 %v991, %v990
      %v993 = vmul.f32 0.5, %v992
      %v994 = vsub.f32 1.5, %v993
      %v995 = vmul.f32 %v990, %v994
      %v996 = vmul.f32 %v905, %v995
      %vm997 = vcmp.eq.f32.partialorder %v905, inf
      %v998 = vsel %vm997, %v905, %v996
      %vm999 = vcmp.eq.f32.partialorder %v905, 0.0
      %v1000 = vand.u32 %v905, 2147483648
      %v1001 = vsel %vm999, %v1000, %v998
      %v1002 = vadd.f32 %v789, 1e-08
      %v1003 = vadd.f32 %v801, 1e-08
      %v1004 = vadd.f32 %v813, 1e-08
      %v1005 = vadd.f32 %v825, 1e-08
      %v1006 = vadd.f32 %v837, 1e-08
      %v1007 = vadd.f32 %v849, 1e-08
      %v1008 = vadd.f32 %v861, 1e-08
      %v1009 = vadd.f32 %v873, 1e-08
      %v1010 = vlog2.pop %v1002
      %v1011 = vmul.f32 %v1010, 0.6931472
      %v1012 = vlog2.pop %v1003
      %v1013 = vmul.f32 %v1012, 0.6931472
      %v1014 = vlog2.pop %v1004
      %v1015 = vmul.f32 %v1014, 0.6931472
      %v1016 = vlog2.pop %v1005
      %v1017 = vmul.f32 %v1016, 0.6931472
      %v1018 = vlog2.pop %v1006
      %v1019 = vmul.f32 %v1018, 0.6931472
      %v1020 = vlog2.pop %v1007
      %v1021 = vmul.f32 %v1020, 0.6931472
      %v1022 = vlog2.pop %v1008
      %v1023 = vmul.f32 %v1022, 0.6931472
      %v1024 = vlog2.pop %v1009
      %v1025 = vmul.f32 %v1024, 0.6931472
      %v1026 = vadd.f32 %v917, 1e-08
      %v1027 = vadd.f32 %v929, 1e-08
      %v1028 = vadd.f32 %v941, 1e-08
      %v1029 = vadd.f32 %v953, 1e-08
      %v1030 = vadd.f32 %v965, 1e-08
      %v1031 = vadd.f32 %v977, 1e-08
      %v1032 = vadd.f32 %v989, 1e-08
      %v1033 = vadd.f32 %v1001, 1e-08
      %v1034 = vlog2.pop %v1026
      %v1035 = vmul.f32 %v1034, 0.6931472
      %v1036 = vlog2.pop %v1027
      %v1037 = vmul.f32 %v1036, 0.6931472
      %v1038 = vlog2.pop %v1028
      %v1039 = vmul.f32 %v1038, 0.6931472
      %v1040 = vlog2.pop %v1029
      %v1041 = vmul.f32 %v1040, 0.6931472
      %v1042 = vlog2.pop %v1030
      %v1043 = vmul.f32 %v1042, 0.6931472
      %v1044 = vlog2.pop %v1031
      %v1045 = vmul.f32 %v1044, 0.6931472
      %v1046 = vlog2.pop %v1032
      %v1047 = vmul.f32 %v1046, 0.6931472
      %v1048 = vlog2.pop %v1033
      %v1049 = vmul.f32 %v1048, 0.6931472
      %v1050 = vsub.f32 %v917, %v789
      %v1051 = vsub.f32 %v929, %v801
      %v1052 = vsub.f32 %v941, %v813
      %v1053 = vsub.f32 %v953, %v825
      %v1054 = vsub.f32 %v965, %v837
      %v1055 = vsub.f32 %v977, %v849
      %v1056 = vsub.f32 %v989, %v861
      %v1057 = vsub.f32 %v1001, %v873
      %v1058 = vsub.f32 %v1035, %v1011
      %v1059 = vsub.f32 %v1037, %v1013
      %v1060 = vsub.f32 %v1039, %v1015
      %v1061 = vsub.f32 %v1041, %v1017
      %v1062 = vsub.f32 %v1043, %v1019
      %v1063 = vsub.f32 %v1045, %v1021
      %v1064 = vsub.f32 %v1047, %v1023
      %v1065 = vsub.f32 %v1049, %v1025
      %v1066 = vand.u32 2147483647, %v1050
      %v1067 = vand.u32 2147483647, %v1051
      %v1068 = vand.u32 2147483647, %v1052
      %v1069 = vand.u32 2147483647, %v1053
      %v1070 = vand.u32 2147483647, %v1054
      %v1071 = vand.u32 2147483647, %v1055
      %v1072 = vand.u32 2147483647, %v1056
      %v1073 = vand.u32 2147483647, %v1057
      %v1074 = vand.u32 2147483647, %v1058
      %v1075 = vand.u32 2147483647, %v1059
      %v1076 = vand.u32 2147483647, %v1060
      %v1077 = vand.u32 2147483647, %v1061
      %v1078 = vand.u32 2147483647, %v1062
      %v1079 = vand.u32 2147483647, %v1063
      %v1080 = vand.u32 2147483647, %v1064
      %v1081 = vand.u32 2147483647, %v1065
      %v1082 = vadd.f32 %v1066, %v1074
      %v1083 = vadd.f32 %v1067, %v1075
      %v1084 = vadd.f32 %v1068, %v1076
      %v1085 = vadd.f32 %v1069, %v1077
      %v1086 = vadd.f32 %v1070, %v1078
      %v1087 = vadd.f32 %v1071, %v1079
      %v1088 = vadd.f32 %v1072, %v1080
      %v1089 = vadd.f32 %v1073, %v1081
      %v1090 = vadd.f32 %v1082, %v1083
      %v1091 = vadd.f32 %v1090, %v1084
      %v1092 = vadd.f32 %v1091, %v1085
      %v1093 = vadd.f32 %v1092, %v1086
      %v1094 = vadd.f32 %v1093, %v1087
      %v1095 = vadd.f32 %v1094, %v1088
      %v1096 = vadd.f32 %v1095, %v1089
      %1097 = vadd.xlane.f32.xlu0 %v1096
      %v1098 = vpop.xlane.xlu0 %1097
      %v1099 = vrot.slane %v1098, 4
      %v1100 = vadd.f32 %v1098, %v1099
      %v1101 = vrot.slane %v1100, 2
      %v1102 = vadd.f32 %v1100, %v1101
      %v1103 = vrot.slane %v1102, 1
      %v1104 = vadd.f32 %v1102, %v1103
      %s1105 = vtos %v1104
      %v1106 = vmul.f32 %v1058, %v1058
      %v1107 = vmul.f32 %v1059, %v1059
      %v1108 = vmul.f32 %v1060, %v1060
      %v1109 = vmul.f32 %v1061, %v1061
      %v1110 = vmul.f32 %v1062, %v1062
      %v1111 = vmul.f32 %v1063, %v1063
      %v1112 = vmul.f32 %v1064, %v1064
      %v1113 = vmul.f32 %v1065, %v1065
      %v1114 = vadd.f32 %v1106, %v1107
      %v1115 = vadd.f32 %v1114, %v1108
      %v1116 = vadd.f32 %v1115, %v1109
      %v1117 = vadd.f32 %v1116, %v1110
      %v1118 = vadd.f32 %v1117, %v1111
      %v1119 = vadd.f32 %v1118, %v1112
      %v1120 = vadd.f32 %v1119, %v1113
      %1121 = vadd.xlane.f32.xlu0 %v1120
      %v1122 = vpop.xlane.xlu0 %1121
      %v1123 = vrot.slane %v1122, 4
      %v1124 = vadd.f32 %v1122, %v1123
      %v1125 = vrot.slane %v1124, 2
      %v1126 = vadd.f32 %v1124, %v1125
      %v1127 = vrot.slane %v1126, 1
      %v1128 = vadd.f32 %v1126, %v1127
      %s1129 = vtos %v1128
      %v1130 = vld [vmem:[%s3] sm:$0xff]
      %v1131 = vld [vmem:[%s3 + $0x8] sm:$0xff]
      %v1132 = vld [vmem:[%s3 + $0x10] sm:$0xff]
      %v1133 = vld [vmem:[%s3 + $0x18] sm:$0xff]
      %v1134 = vld [vmem:[%s3 + $0x20] sm:$0xff]
      %v1135 = vld [vmem:[%s3 + $0x28] sm:$0xff]
      %v1136 = vld [vmem:[%s3 + $0x30] sm:$0xff]
      %v1137 = vld [vmem:[%s3 + $0x38] sm:$0xff]
      %v1138 = vld [vmem:[%s3 + $0x40] sm:$0xff]
      %v1139 = vld [vmem:[%s3 + $0x48] sm:$0xff]
      %v1140 = vld [vmem:[%s3 + $0x50] sm:$0xff]
      %v1141 = vld [vmem:[%s3 + $0x58] sm:$0xff]
      %v1142 = vld [vmem:[%s3 + $0x60] sm:$0xff]
      %v1143 = vld [vmem:[%s3 + $0x68] sm:$0xff]
      %v1144 = vld [vmem:[%s3 + $0x70] sm:$0xff]
      %v1145 = vld [vmem:[%s3 + $0x78] sm:$0xff]
      %1146 = vmatpush.msra.mxu0 %v1145
      %1147 = vmatpush.msra.mxu0 %v1144
      %1148 = vmatpush.msra.mxu0 %v1143
      %1149 = vmatpush.msra.mxu0 %v1142
      %1150 = vmatpush.msra.mxu0 %v1141
      %1151 = vmatpush.msra.mxu0 %v1140
      %1152 = vmatpush.msra.mxu0 %v1139
      %1153 = vmatpush.msra.mxu0 %v1138
      %1154 = vmatpush.msra.mxu0 %v1137
      %1155 = vmatpush.msra.mxu0 %v1136
      %1156 = vmatpush.msra.mxu0 %v1135
      %1157 = vmatpush.msra.mxu0 %v1134
      %1158 = vmatpush.msra.mxu0 %v1133
      %1159 = vmatpush.msra.mxu0 %v1132
      %1160 = vmatpush.msra.mxu0 %v1131
      %1161 = vmatpush.msra.mxu0 %v1130
      %1162 = vmatmul.f32.gmra.mxu0 %v789
      %v1163 = vpop.f32.mrf.mxu0
      %v1164 = vadd.f32 0.0, %v1163
      %1165 = vmatmul.f32.gmra.mxu0 %v801
      %v1166 = vpop.f32.mrf.mxu0
      %v1167 = vadd.f32 0.0, %v1166
      %1168 = vmatmul.f32.gmra.mxu0 %v813
      %v1169 = vpop.f32.mrf.mxu0
      %v1170 = vadd.f32 0.0, %v1169
      %1171 = vmatmul.f32.gmra.mxu0 %v825
      %v1172 = vpop.f32.mrf.mxu0
      %v1173 = vadd.f32 0.0, %v1172
      %1174 = vmatmul.f32.gmra.mxu0 %v837
      %v1175 = vpop.f32.mrf.mxu0
      %v1176 = vadd.f32 0.0, %v1175
      %1177 = vmatmul.f32.gmra.mxu0 %v849
      %v1178 = vpop.f32.mrf.mxu0
      %v1179 = vadd.f32 0.0, %v1178
      %1180 = vmatmul.f32.gmra.mxu0 %v861
      %v1181 = vpop.f32.mrf.mxu0
      %v1182 = vadd.f32 0.0, %v1181
      %1183 = vmatmul.f32.gmra.mxu0 %v873
      %v1184 = vpop.f32.mrf.mxu0
      %v1185 = vadd.f32 0.0, %v1184
      %1186 = vdwg.mxu0
      %1187 = vmatpush.msra.mxu0 %v1145
      %1188 = vmatpush.msra.mxu0 %v1144
      %1189 = vmatpush.msra.mxu0 %v1143
      %1190 = vmatpush.msra.mxu0 %v1142
      %1191 = vmatpush.msra.mxu0 %v1141
      %1192 = vmatpush.msra.mxu0 %v1140
      %1193 = vmatpush.msra.mxu0 %v1139
      %1194 = vmatpush.msra.mxu0 %v1138
      %1195 = vmatpush.msra.mxu0 %v1137
      %1196 = vmatpush.msra.mxu0 %v1136
      %1197 = vmatpush.msra.mxu0 %v1135
      %1198 = vmatpush.msra.mxu0 %v1134
      %1199 = vmatpush.msra.mxu0 %v1133
      %1200 = vmatpush.msra.mxu0 %v1132
      %1201 = vmatpush.msra.mxu0 %v1131
      %1202 = vmatpush.msra.mxu0 %v1130
      %1203 = vmatmul.f32.gmra.mxu0 %v917
      %v1204 = vpop.f32.mrf.mxu0
      %v1205 = vadd.f32 0.0, %v1204
      %1206 = vmatmul.f32.gmra.mxu0 %v929
      %v1207 = vpop.f32.mrf.mxu0
      %v1208 = vadd.f32 0.0, %v1207
      %1209 = vmatmul.f32.gmra.mxu0 %v941
      %v1210 = vpop.f32.mrf.mxu0
      %v1211 = vadd.f32 0.0, %v1210
      %1212 = vmatmul.f32.gmra.mxu0 %v953
      %v1213 = vpop.f32.mrf.mxu0
      %v1214 = vadd.f32 0.0, %v1213
      %1215 = vmatmul.f32.gmra.mxu0 %v965
      %v1216 = vpop.f32.mrf.mxu0
      %v1217 = vadd.f32 0.0, %v1216
      %1218 = vmatmul.f32.gmra.mxu0 %v977
      %v1219 = vpop.f32.mrf.mxu0
      %v1220 = vadd.f32 0.0, %v1219
      %1221 = vmatmul.f32.gmra.mxu0 %v989
      %v1222 = vpop.f32.mrf.mxu0
      %v1223 = vadd.f32 0.0, %v1222
      %1224 = vmatmul.f32.gmra.mxu0 %v1001
      %v1225 = vpop.f32.mrf.mxu0
      %v1226 = vadd.f32 0.0, %v1225
      %1227 = vdwg.mxu0
      %v1228 = vadd.f32 %v1164, 1e-08
      %v1229 = vadd.f32 %v1167, 1e-08
      %v1230 = vadd.f32 %v1170, 1e-08
      %v1231 = vadd.f32 %v1173, 1e-08
      %v1232 = vadd.f32 %v1176, 1e-08
      %v1233 = vadd.f32 %v1179, 1e-08
      %v1234 = vadd.f32 %v1182, 1e-08
      %v1235 = vadd.f32 %v1185, 1e-08
      %v1236 = vlog2.pop %v1228
      %v1237 = vmul.f32 %v1236, 0.6931472
      %v1238 = vlog2.pop %v1229
      %v1239 = vmul.f32 %v1238, 0.6931472
      %v1240 = vlog2.pop %v1230
      %v1241 = vmul.f32 %v1240, 0.6931472
      %v1242 = vlog2.pop %v1231
      %v1243 = vmul.f32 %v1242, 0.6931472
      %v1244 = vlog2.pop %v1232
      %v1245 = vmul.f32 %v1244, 0.6931472
      %v1246 = vlog2.pop %v1233
      %v1247 = vmul.f32 %v1246, 0.6931472
      %v1248 = vlog2.pop %v1234
      %v1249 = vmul.f32 %v1248, 0.6931472
      %v1250 = vlog2.pop %v1235
      %v1251 = vmul.f32 %v1250, 0.6931472
      %v1252 = vadd.f32 %v1205, 1e-08
      %v1253 = vadd.f32 %v1208, 1e-08
      %v1254 = vadd.f32 %v1211, 1e-08
      %v1255 = vadd.f32 %v1214, 1e-08
      %v1256 = vadd.f32 %v1217, 1e-08
      %v1257 = vadd.f32 %v1220, 1e-08
      %v1258 = vadd.f32 %v1223, 1e-08
      %v1259 = vadd.f32 %v1226, 1e-08
      %v1260 = vlog2.pop %v1252
      %v1261 = vmul.f32 %v1260, 0.6931472
      %v1262 = vlog2.pop %v1253
      %v1263 = vmul.f32 %v1262, 0.6931472
      %v1264 = vlog2.pop %v1254
      %v1265 = vmul.f32 %v1264, 0.6931472
      %v1266 = vlog2.pop %v1255
      %v1267 = vmul.f32 %v1266, 0.6931472
      %v1268 = vlog2.pop %v1256
      %v1269 = vmul.f32 %v1268, 0.6931472
      %v1270 = vlog2.pop %v1257
      %v1271 = vmul.f32 %v1270, 0.6931472
      %v1272 = vlog2.pop %v1258
      %v1273 = vmul.f32 %v1272, 0.6931472
      %v1274 = vlog2.pop %v1259
      %v1275 = vmul.f32 %v1274, 0.6931472
      %v1276 = vsub.f32 %v1205, %v1164
      %v1277 = vsub.f32 %v1208, %v1167
      %v1278 = vsub.f32 %v1211, %v1170
      %v1279 = vsub.f32 %v1214, %v1173
      %v1280 = vsub.f32 %v1217, %v1176
      %v1281 = vsub.f32 %v1220, %v1179
      %v1282 = vsub.f32 %v1223, %v1182
      %v1283 = vsub.f32 %v1226, %v1185
      %v1284 = vand.u32 2147483647, %v1276
      %v1285 = vand.u32 2147483647, %v1277
      %v1286 = vand.u32 2147483647, %v1278
      %v1287 = vand.u32 2147483647, %v1279
      %v1288 = vand.u32 2147483647, %v1280
      %v1289 = vand.u32 2147483647, %v1281
      %v1290 = vand.u32 2147483647, %v1282
      %v1291 = vand.u32 2147483647, %v1283
      %v1292 = vsub.f32 %v1261, %v1237
      %v1293 = vsub.f32 %v1263, %v1239
      %v1294 = vsub.f32 %v1265, %v1241
      %v1295 = vsub.f32 %v1267, %v1243
      %v1296 = vsub.f32 %v1269, %v1245
      %v1297 = vsub.f32 %v1271, %v1247
      %v1298 = vsub.f32 %v1273, %v1249
      %v1299 = vsub.f32 %v1275, %v1251
      %v1300 = vand.u32 2147483647, %v1292
      %v1301 = vand.u32 2147483647, %v1293
      %v1302 = vand.u32 2147483647, %v1294
      %v1303 = vand.u32 2147483647, %v1295
      %v1304 = vand.u32 2147483647, %v1296
      %v1305 = vand.u32 2147483647, %v1297
      %v1306 = vand.u32 2147483647, %v1298
      %v1307 = vand.u32 2147483647, %v1299
      %v1308 = vadd.f32 %v1284, %v1300
      %v1309 = vadd.f32 %v1285, %v1301
      %v1310 = vadd.f32 %v1286, %v1302
      %v1311 = vadd.f32 %v1287, %v1303
      %v1312 = vadd.f32 %v1288, %v1304
      %v1313 = vadd.f32 %v1289, %v1305
      %v1314 = vadd.f32 %v1290, %v1306
      %v1315 = vadd.f32 %v1291, %v1307
      %v1316 = vadd.f32 %v1308, %v1309
      %v1317 = vadd.f32 %v1316, %v1310
      %v1318 = vadd.f32 %v1317, %v1311
      %v1319 = vadd.f32 %v1318, %v1312
      %v1320 = vadd.f32 %v1319, %v1313
      %v1321 = vadd.f32 %v1320, %v1314
      %v1322 = vadd.f32 %v1321, %v1315
      %1323 = vadd.xlane.f32.xlu0 %v1322
      %v1324 = vpop.xlane.xlu0 %1323
      %v1325 = vrot.slane %v1324, 4
      %v1326 = vadd.f32 %v1324, %v1325
      %v1327 = vrot.slane %v1326, 2
      %v1328 = vadd.f32 %v1326, %v1327
      %v1329 = vrot.slane %v1328, 1
      %v1330 = vadd.f32 %v1328, %v1329
      %s1331 = vtos %v1330
      %v1332 = vlaneseq
      %v1333 = vshrl.u32 %v1332, 7
      %v1334 = vlaneseq
      %v1335 = vand.u32 %v1334, 127
      %vm1336 = vcmp.eq.s32.totalorder %v1333, 0
      %vm1337 = vcmp.eq.s32.totalorder %v1335, 0
      %vm1338 = vmand %vm1336, %vm1337
      %v1339 = vstv %s1105
      %v1340 = vsel %vm1338, %v1339, 0.0
      %v1341 = vadd.f32 %v1340, 0.0
      %vm1342 = vcmp.eq.s32.totalorder %v1335, 1
      %vm1343 = vmand %vm1336, %vm1342
      %v1344 = vstv %s1129
      %v1345 = vsel %vm1343, %v1344, 0.0
      %v1346 = vadd.f32 %v1341, %v1345
      %vm1347 = vcmp.eq.s32.totalorder %v1335, 2
      %vm1348 = vmand %vm1336, %vm1347
      %v1349 = vstv %s1331
      %v1350 = vsel %vm1348, %v1349, 0.0
      %v1351 = vadd.f32 %v1346, %v1350
      %1352 = vst [vmem:[%s225] sm:$0xff] %v1351
      %p1353 = scmp.lt.s32.totalorder %s15, 1
      %s1354 = scalar_select %p1353, %s15, 1
      %s1355 = smul.addr %s1354, 8
      %s1356 = scalar_lea.vmem %s4, %s1355
      // Predicated region
      $region37: #{reconstruction_loss.3} parent=35 // pred_check
        %p1357 = pneg %p127
      $region38: #{reconstruction_loss.3} parent=35 // pred_check_branch
        %1359 = sbr.rel (%p1357) target = $region40
      $region39: #{reconstruction_loss.3} parent=35 // pred_region
        _
      $region40: #{reconstruction_loss.3} parent=35 // pred_fallthru
        _
    $region36: #{reconstruction_loss.3} parent=5 // pred_fallthru
      _
    %p1360 = scmp.le.s32.totalorder 2, %s10
    // Predicated region
    $region41: #{reconstruction_loss.3} parent=5 // pred_check
      %p1361 = pneg %p1360
    $region42: #{reconstruction_loss.3} parent=5 // pred_check_branch
      %1363 = sbr.rel (%p1361) target = $region44
    $region43: #{reconstruction_loss.3} parent=5 // pred_region
      %s1364 = ssub.s32 %s10, 2
      // Predicated region
      $region45: #{reconstruction_loss.3} parent=43 // pred_check
        %p1365 = pneg %p133
      $region46: #{reconstruction_loss.3} parent=43 // pred_check_branch
        %1367 = sbr.rel (%p1365) target = $region48
      $region47: #{reconstruction_loss.3} parent=43 // pred_region
        %p1368 = scmp.lt.s32.totalorder %s16, 1
        %s1369 = scalar_select %p1368, %s16, 1
        %s1370 = smul.addr %s1369, 8
        %s1371 = scalar_lea.vmem %s4, %s1370
      $region48: #{reconstruction_loss.3} parent=43 // pred_fallthru
        _
    $region44: #{reconstruction_loss.3} parent=5 // pred_fallthru
      _
  $region6: #{reconstruction_loss.3} parent=0 // loop_footer
    %s14 = sadd.s32 1, %s10
  $region7: #{reconstruction_loss.3} parent=0 // loop_footer_branch
    %9 = sbr.rel target = $region3
  $region8: #{reconstruction_loss.3} parent=0 // loop_exit
    _

</llo_original>
